<compile_context>
chip_gen: v7x
topology: tpu7x:2x2x1
jax: 0.10.0
libtpu: 0.0.40
codegen_flags: <defaults>
</compile_context>

<pallas_src>
import functools

import jax
import jax.numpy as jnp
from jax import lax
from jax.experimental import pallas as pl
from jax.experimental.pallas import tpu as pltpu


def _cdiv(a, b):
    return -(-a // b)


def _round_up(a, b):
    return _cdiv(a, b) * b


# ----------------------------- Pallas kernel -------------------------------

def _mgu_kernel(cur_ref, halo_ref, w_ref, o_ref, stack_ref, *, hd, ctp, tm, offs):
    # Build the (S*Ctp, tm) stacked tap window: for every conv tap with static
    # flat offset `off`, the lane-shifted slice [off, off+tm) of
    # (current tile ++ right halo).  Every write is to a 16-aligned sublane
    # block (ctp is a multiple of 16), so no packed-row RMW.
    for s, off in enumerate(offs):
        r0 = s * ctp
        if off == 0:
            stack_ref[r0:r0 + ctp, :] = cur_ref[...]
        else:
            stack_ref[r0:r0 + ctp, :tm - off] = cur_ref[:, off:]
            stack_ref[r0:r0 + ctp, tm - off:] = halo_ref[:, :off]

    # One wide MXU matmul; bias comes out of the matmul via the ones channel.
    # acc rows = [f_pre ; c_ih_pre ; c_hh_pre ; hx(center tap)].
    acc = jnp.dot(w_ref[...], stack_ref[...], preferred_element_type=jnp.float32)

    f = jax.nn.sigmoid(acc[:hd])
    c = jnp.tanh(acc[hd:2 * hd] + f * acc[2 * hd:3 * hd])
    hxv = acc[3 * hd:]
    o_ref[...] = c + f * (hxv - c)


# ------------------------------- glue (JAX) --------------------------------

@functools.partial(jax.jit, static_argnames=("kernel_size", "dilation", "tm"))
def conv_mgu_cell(x, hx, w_ih, b_ih, w_hh, *, kernel_size, dilation, tm=2048):
    """x: (N, Cin, H, W) f32; hx: (N, Hd, H, W) f32. Returns (N, Hd, H, W) f32."""
    N, Cin, H, W = x.shape
    Hd = hx.shape[1]
    k, d = kernel_size, dilation
    assert (d * (k - 1)) % 2 == 0, "module requires a same-size convolution"
    assert k >= 2, "1x1 conv path not implemented"
    p = (d * (k - 1)) // 2

    Hp, Wp = H + 2 * p, W + 2 * p
    R = N * Hp * Wp                               # flat padded-pixel count

    # Conv taps as static offsets on the flat (channels-first) padded axis.
    offs = [ki * d * Wp + kj * d for ki in range(k) for kj in range(k)]
    center = p * Wp + p                           # offset of the pixel itself
    if center not in offs:                        # (even-k case) extra tap for hx
        offs.append(center)
    offs = tuple(offs)
    s_center = offs.index(center)
    S = len(offs)
    hlen = max(offs)
    hlen_r = _round_up(hlen, 128)                 # lane-dense halo block

    # Tile size: large to amortize per-step overhead, but keep >=2 grid steps
    # (v7x: 2 TensorCores on a "parallel" axis) and tm > hlen.
    tm = min(tm, _round_up(_cdiv(R, 2), 128))
    tm = max(tm, _round_up(hlen + 1, 128), 128)
    assert tm % 128 == 0 and hlen < tm
    grid = _cdiv(R, tm)

    Ct = Hd + Cin + 1                             # [h ; x ; ones(bias)]
    Ctp = _round_up(Ct, 16)                       # bf16 sublane-tile aligned taps

    # --- activations: cast to bf16 first, pad, concat, channels-first flat ---
    hpad = jnp.pad(hx.astype(jnp.bfloat16), ((0, 0), (0, 0), (p, p), (p, p)))
    xpad = jnp.pad(x.astype(jnp.bfloat16), ((0, 0), (0, 0), (p, p), (p, p)))
    ones = jnp.ones((N, 1, Hp, Wp), jnp.bfloat16)
    comb = jnp.concatenate([hpad, xpad, ones], axis=1)          # (N, Ct, Hp, Wp)
    comb = jnp.pad(comb, ((0, 0), (0, Ctp - Ct), (0, 0), (0, 0)))
    comb_t = comb.transpose(1, 0, 2, 3).reshape(Ctp, R)          # (Ctp, R)
    total = grid * tm + hlen_r                    # pad by hlen_r only, not a tile
    comb_e = jnp.pad(comb_t, ((0, 0), (0, total - R)))
    main = comb_e[:, :grid * tm]
    # Right halo of tile i = columns [(i+1)*tm, (i+1)*tm + hlen_r).
    hidx = (jnp.arange(grid)[:, None] + 1) * tm + jnp.arange(hlen_r)[None, :]
    halo = jnp.take(comb_e, hidx, axis=1).reshape(Ctp, grid * hlen_r)

    # --- weights: one (4*Hd, S*Ctp) bf16 matrix (bias + hx-passthrough folded).
    wih_f, wih_c = w_ih[:Hd], w_ih[Hd:]           # (Hd, Cin, k, k)
    whh_f, whh_c = w_hh[:Hd], w_hh[Hd:]           # (Hd, Hd, k, k)
    Wm = jnp.zeros((4 * Hd, S, Ctp), jnp.float32)
    for s in range(k * k):
        ki, kj = divmod(s, k)
        Wm = Wm.at[0 * Hd:1 * Hd, s, 0:Hd].set(whh_f[:, :, ki, kj])         # forget (hh)
        Wm = Wm.at[0 * Hd:1 * Hd, s, Hd:Hd + Cin].set(wih_f[:, :, ki, kj])  # forget (ih)
        Wm = Wm.at[1 * Hd:2 * Hd, s, Hd:Hd + Cin].set(wih_c[:, :, ki, kj])  # cand (ih)
        Wm = Wm.at[2 * Hd:3 * Hd, s, 0:Hd].set(whh_c[:, :, ki, kj])         # cand (hh)
    Wm = Wm.at[0 * Hd:1 * Hd, 0, Hd + Cin].set(b_ih[:Hd])     # bias via ones channel
    Wm = Wm.at[1 * Hd:2 * Hd, 0, Hd + Cin].set(b_ih[Hd:])
    Wm = Wm.at[3 * Hd:4 * Hd, s_center, 0:Hd].set(jnp.eye(Hd))  # hx pass-through
    w_all = Wm.reshape(4 * Hd, S * Ctp).astype(jnp.bfloat16)

    kernel = functools.partial(_mgu_kernel, hd=Hd, ctp=Ctp, tm=tm, offs=offs)

    out_t = pl.pallas_call(
        kernel,
        out_shape=jax.ShapeDtypeStruct((Hd, grid * tm), jnp.float32),
        grid_spec=pltpu.PrefetchScalarGridSpec(
            num_scalar_prefetch=0,
            grid=(grid,),
            in_specs=[
                pl.BlockSpec((Ctp, tm), lambda i: (0, i)),          # pixel tile
                pl.BlockSpec((Ctp, hlen_r), lambda i: (0, i)),      # right halo
                pl.BlockSpec((4 * Hd, S * Ctp), lambda i: (0, 0)),  # fused weights
            ],
            out_specs=pl.BlockSpec((Hd, tm), lambda i: (0, i)),
            scratch_shapes=[pltpu.VMEM((S * Ctp, tm), jnp.bfloat16)],
        ),
        compiler_params=pltpu.CompilerParams(
            dimension_semantics=("parallel",)),
    )(main, halo, w_all)

    # Drop pad / border garbage columns and go back to NCHW.
    out = out_t[:, :R].reshape(Hd, N, Hp, Wp)[:, :, :H, :W]
    return out.transpose(1, 0, 2, 3)


# --------------------------- pure-JAX reference ----------------------------

def _conv2d_ref(x, w, b, dilation, padding):
    out = lax.conv_general_dilated(
        x, w, window_strides=(1, 1),
        padding=[(padding, padding), (padding, padding)],
        rhs_dilation=(dilation, dilation),
        dimension_numbers=("NCHW", "OIHW", "NCHW"),
        precision=lax.Precision.HIGHEST)
    if b is not None:
        out = out + b[None, :, None, None]
    return out


def conv_mgu_cell_ref(x, hx, w_ih, b_ih, w_hh, kernel_size, dilation):
    pad = (dilation * (kernel_size - 1)) // 2
    Hd = hx.shape[1]
    ih = _conv2d_ref(x, w_ih, b_ih, dilation, pad)
    hh = _conv2d_ref(hx, w_hh, None, dilation, pad)
    f = jax.nn.sigmoid(ih[:, :Hd] + hh[:, :Hd])
    c = jnp.tanh(ih[:, Hd:] + f * hh[:, Hd:])
    return c + f * (hx - c)


# --------------------------------- main -------------------------------------

if __name__ == "__main__":
    N, Cin, Hd, Hsp, Wsp = 2, 4, 32, 16, 16
    kernel_size, dilation = 3, 1

    key = jax.random.PRNGKey(0)
    kx, kh, kwi, kwh, kb = jax.random.split(key, 5)

    x = jax.random.normal(kx, (N, Cin, Hsp, Wsp), dtype=jnp.float32)
    hx = jax.random.normal(kh, (N, Hd, Hsp, Wsp), dtype=jnp.float32)

    # Synthetic parameters (shapes match the module's nn.Conv2d layers).
    w_ih = 0.1 * jax.random.normal(kwi, (2 * Hd, Cin, kernel_size, kernel_size),
                                   dtype=jnp.float32)
    w_hh = 0.1 * jax.random.normal(kwh, (2 * Hd, Hd, kernel_size, kernel_size),
                                   dtype=jnp.float32)
    b_ih = 0.1 * jax.random.normal(kb, (2 * Hd,), dtype=jnp.float32)

    out = conv_mgu_cell(x, hx, w_ih, b_ih, w_hh,
                        kernel_size=kernel_size, dilation=dilation)
    out = jax.block_until_ready(out)
    assert out.shape == hx.shape and out.dtype == jnp.float32

    # Tight check: reference fed the same bf16-rounded operands the kernel uses
    # (only accumulation order differs -> should agree to ~1e-4).
    bf = lambda a: a.astype(jnp.bfloat16).astype(jnp.float32)
    ref_bf = conv_mgu_cell_ref(bf(x), bf(hx), bf(w_ih), bf(b_ih), bf(w_hh),
                               kernel_size, dilation)
    err_tight = float(jnp.max(jnp.abs(out - ref_bf)))
    assert err_tight < 5e-3, f"tight max err {err_tight}"

    # Loose check against full-f32 module semantics (bf16 operand rounding is
    # the only systematic difference).
    ref_32 = conv_mgu_cell_ref(x, hx, w_ih, b_ih, w_hh, kernel_size, dilation)
    err_loose = float(jnp.max(jnp.abs(out - ref_32)))
    assert err_loose < 1.5e-1, f"loose max err {err_loose}"

    print("KERNEL_OK")
</pallas_src>

<mosaic_0001>
module attributes {stable_mosaic.version = 11 : i64} {
  func.func @_mgu_kernel(%arg0: i32, %arg1: memref<48x384xbf16, #tpu.memory_space<vmem>>, %arg2: memref<48x128xbf16, #tpu.memory_space<vmem>>, %arg3: memref<128x432xbf16, #tpu.memory_space<vmem>>, %arg4: memref<32x384xf32, #tpu.memory_space<vmem>>, %arg5: memref<432x384xbf16, #tpu.memory_space<vmem>>) attributes {dimension_semantics = [#tpu.dimension_semantics<parallel>], iteration_bounds = array<i64: 2>, scalar_prefetch = 0 : i64, scratch_operands = 1 : i64, tpu.core_type = #tpu.core_type<tc>, window_params = [{transform_indices = @transform_0, window_bounds = array<i64: 48, 384>}, {transform_indices = @transform_1, window_bounds = array<i64: 48, 128>}, {pipeline_mode = #tpu.pipeline_mode<synchronous>, transform_indices = @transform_2, window_bounds = array<i64: 128, 432>}, {transform_indices = @transform_3, window_bounds = array<i64: 32, 384>}]} {
    %c0 = arith.constant 0 : index
    %c0_0 = arith.constant 0 : index
    %0 = vector.load %arg1[%c0, %c0_0] : memref<48x384xbf16, #tpu.memory_space<vmem>>, vector<48x384xbf16>
    %c0_1 = arith.constant 0 : index
    %c0_2 = arith.constant 0 : index
    %1 = vector.load %arg5[%c0_1, %c0_2] : memref<432x384xbf16, #tpu.memory_space<vmem>>, vector<48x384xbf16>
    tpu.vector_store %arg5[%c0_1, %c0_2], %0 {strides = array<i32>} : memref<432x384xbf16, #tpu.memory_space<vmem>>, vector<48x384xbf16>,
    %c0_3 = arith.constant 0 : index
    %c1 = arith.constant 1 : index
    %2 = vector.load %arg1[%c0_3, %c1] : memref<48x384xbf16, #tpu.memory_space<vmem>>, vector<48x383xbf16>
    %c48 = arith.constant 48 : index
    %c0_4 = arith.constant 0 : index
    %3 = vector.load %arg5[%c48, %c0_4] : memref<432x384xbf16, #tpu.memory_space<vmem>>, vector<48x383xbf16>
    tpu.vector_store %arg5[%c48, %c0_4], %2 {strides = array<i32>} : memref<432x384xbf16, #tpu.memory_space<vmem>>, vector<48x383xbf16>,
    %c0_5 = arith.constant 0 : index
    %c0_6 = arith.constant 0 : index
    %4 = vector.load %arg2[%c0_5, %c0_6] : memref<48x128xbf16, #tpu.memory_space<vmem>>, vector<48x1xbf16>
    %c48_7 = arith.constant 48 : index
    %c383 = arith.constant 383 : index
    %5 = vector.load %arg5[%c48_7, %c383] : memref<432x384xbf16, #tpu.memory_space<vmem>>, vector<48x1xbf16>
    tpu.vector_store %arg5[%c48_7, %c383], %4 {strides = array<i32>} : memref<432x384xbf16, #tpu.memory_space<vmem>>, vector<48x1xbf16>,
    %c0_8 = arith.constant 0 : index
    %c2 = arith.constant 2 : index
    %6 = vector.load %arg1[%c0_8, %c2] : memref<48x384xbf16, #tpu.memory_space<vmem>>, vector<48x382xbf16>
    %c96 = arith.constant 96 : index
    %c0_9 = arith.constant 0 : index
    %7 = vector.load %arg5[%c96, %c0_9] : memref<432x384xbf16, #tpu.memory_space<vmem>>, vector<48x382xbf16>
    tpu.vector_store %arg5[%c96, %c0_9], %6 {strides = array<i32>} : memref<432x384xbf16, #tpu.memory_space<vmem>>, vector<48x382xbf16>,
    %c0_10 = arith.constant 0 : index
    %c0_11 = arith.constant 0 : index
    %8 = vector.load %arg2[%c0_10, %c0_11] : memref<48x128xbf16, #tpu.memory_space<vmem>>, vector<48x2xbf16>
    %c96_12 = arith.constant 96 : index
    %c382 = arith.constant 382 : index
    %9 = vector.load %arg5[%c96_12, %c382] : memref<432x384xbf16, #tpu.memory_space<vmem>>, vector<48x2xbf16>
    tpu.vector_store %arg5[%c96_12, %c382], %8 {strides = array<i32>} : memref<432x384xbf16, #tpu.memory_space<vmem>>, vector<48x2xbf16>,
    %c0_13 = arith.constant 0 : index
    %c18 = arith.constant 18 : index
    %10 = vector.load %arg1[%c0_13, %c18] : memref<48x384xbf16, #tpu.memory_space<vmem>>, vector<48x366xbf16>
    %c144 = arith.constant 144 : index
    %c0_14 = arith.constant 0 : index
    %11 = vector.load %arg5[%c144, %c0_14] : memref<432x384xbf16, #tpu.memory_space<vmem>>, vector<48x366xbf16>
    tpu.vector_store %arg5[%c144, %c0_14], %10 {strides = array<i32>} : memref<432x384xbf16, #tpu.memory_space<vmem>>, vector<48x366xbf16>,
    %c0_15 = arith.constant 0 : index
    %c0_16 = arith.constant 0 : index
    %12 = vector.load %arg2[%c0_15, %c0_16] : memref<48x128xbf16, #tpu.memory_space<vmem>>, vector<48x18xbf16>
    %c144_17 = arith.constant 144 : index
    %c366 = arith.constant 366 : index
    %13 = vector.load %arg5[%c144_17, %c366] : memref<432x384xbf16, #tpu.memory_space<vmem>>, vector<48x18xbf16>
    tpu.vector_store %arg5[%c144_17, %c366], %12 {strides = array<i32>} : memref<432x384xbf16, #tpu.memory_space<vmem>>, vector<48x18xbf16>,
    %c0_18 = arith.constant 0 : index
    %c19 = arith.constant 19 : index
    %14 = vector.load %arg1[%c0_18, %c19] : memref<48x384xbf16, #tpu.memory_space<vmem>>, vector<48x365xbf16>
    %c192 = arith.constant 192 : index
    %c0_19 = arith.constant 0 : index
    %15 = vector.load %arg5[%c192, %c0_19] : memref<432x384xbf16, #tpu.memory_space<vmem>>, vector<48x365xbf16>
    tpu.vector_store %arg5[%c192, %c0_19], %14 {strides = array<i32>} : memref<432x384xbf16, #tpu.memory_space<vmem>>, vector<48x365xbf16>,
    %c0_20 = arith.constant 0 : index
    %c0_21 = arith.constant 0 : index
    %16 = vector.load %arg2[%c0_20, %c0_21] : memref<48x128xbf16, #tpu.memory_space<vmem>>, vector<48x19xbf16>
    %c192_22 = arith.constant 192 : index
    %c365 = arith.constant 365 : index
    %17 = vector.load %arg5[%c192_22, %c365] : memref<432x384xbf16, #tpu.memory_space<vmem>>, vector<48x19xbf16>
    tpu.vector_store %arg5[%c192_22, %c365], %16 {strides = array<i32>} : memref<432x384xbf16, #tpu.memory_space<vmem>>, vector<48x19xbf16>,
    %c0_23 = arith.constant 0 : index
    %c20 = arith.constant 20 : index
    %18 = vector.load %arg1[%c0_23, %c20] : memref<48x384xbf16, #tpu.memory_space<vmem>>, vector<48x364xbf16>
    %c240 = arith.constant 240 : index
    %c0_24 = arith.constant 0 : index
    %19 = vector.load %arg5[%c240, %c0_24] : memref<432x384xbf16, #tpu.memory_space<vmem>>, vector<48x364xbf16>
    tpu.vector_store %arg5[%c240, %c0_24], %18 {strides = array<i32>} : memref<432x384xbf16, #tpu.memory_space<vmem>>, vector<48x364xbf16>,
    %c0_25 = arith.constant 0 : index
    %c0_26 = arith.constant 0 : index
    %20 = vector.load %arg2[%c0_25, %c0_26] : memref<48x128xbf16, #tpu.memory_space<vmem>>, vector<48x20xbf16>
    %c240_27 = arith.constant 240 : index
    %c364 = arith.constant 364 : index
    %21 = vector.load %arg5[%c240_27, %c364] : memref<432x384xbf16, #tpu.memory_space<vmem>>, vector<48x20xbf16>
    tpu.vector_store %arg5[%c240_27, %c364], %20 {strides = array<i32>} : memref<432x384xbf16, #tpu.memory_space<vmem>>, vector<48x20xbf16>,
    %c0_28 = arith.constant 0 : index
    %c36 = arith.constant 36 : index
    %22 = vector.load %arg1[%c0_28, %c36] : memref<48x384xbf16, #tpu.memory_space<vmem>>, vector<48x348xbf16>
    %c288 = arith.constant 288 : index
    %c0_29 = arith.constant 0 : index
    %23 = vector.load %arg5[%c288, %c0_29] : memref<432x384xbf16, #tpu.memory_space<vmem>>, vector<48x348xbf16>
    tpu.vector_store %arg5[%c288, %c0_29], %22 {strides = array<i32>} : memref<432x384xbf16, #tpu.memory_space<vmem>>, vector<48x348xbf16>,
    %c0_30 = arith.constant 0 : index
    %c0_31 = arith.constant 0 : index
    %24 = vector.load %arg2[%c0_30, %c0_31] : memref<48x128xbf16, #tpu.memory_space<vmem>>, vector<48x36xbf16>
    %c288_32 = arith.constant 288 : index
    %c348 = arith.constant 348 : index
    %25 = vector.load %arg5[%c288_32, %c348] : memref<432x384xbf16, #tpu.memory_space<vmem>>, vector<48x36xbf16>
    tpu.vector_store %arg5[%c288_32, %c348], %24 {strides = array<i32>} : memref<432x384xbf16, #tpu.memory_space<vmem>>, vector<48x36xbf16>,
    %c0_33 = arith.constant 0 : index
    %c37 = arith.constant 37 : index
    %26 = vector.load %arg1[%c0_33, %c37] : memref<48x384xbf16, #tpu.memory_space<vmem>>, vector<48x347xbf16>
    %c336 = arith.constant 336 : index
    %c0_34 = arith.constant 0 : index
    %27 = vector.load %arg5[%c336, %c0_34] : memref<432x384xbf16, #tpu.memory_space<vmem>>, vector<48x347xbf16>
    tpu.vector_store %arg5[%c336, %c0_34], %26 {strides = array<i32>} : memref<432x384xbf16, #tpu.memory_space<vmem>>, vector<48x347xbf16>,
    %c0_35 = arith.constant 0 : index
    %c0_36 = arith.constant 0 : index
    %28 = vector.load %arg2[%c0_35, %c0_36] : memref<48x128xbf16, #tpu.memory_space<vmem>>, vector<48x37xbf16>
    %c336_37 = arith.constant 336 : index
    %c347 = arith.constant 347 : index
    %29 = vector.load %arg5[%c336_37, %c347] : memref<432x384xbf16, #tpu.memory_space<vmem>>, vector<48x37xbf16>
    tpu.vector_store %arg5[%c336_37, %c347], %28 {strides = array<i32>} : memref<432x384xbf16, #tpu.memory_space<vmem>>, vector<48x37xbf16>,
    %c0_38 = arith.constant 0 : index
    %c38 = arith.constant 38 : index
    %30 = vector.load %arg1[%c0_38, %c38] : memref<48x384xbf16, #tpu.memory_space<vmem>>, vector<48x346xbf16>
    %c384 = arith.constant 384 : index
    %c0_39 = arith.constant 0 : index
    %31 = vector.load %arg5[%c384, %c0_39] : memref<432x384xbf16, #tpu.memory_space<vmem>>, vector<48x346xbf16>
    tpu.vector_store %arg5[%c384, %c0_39], %30 {strides = array<i32>} : memref<432x384xbf16, #tpu.memory_space<vmem>>, vector<48x346xbf16>,
    %c0_40 = arith.constant 0 : index
    %c0_41 = arith.constant 0 : index
    %32 = vector.load %arg2[%c0_40, %c0_41] : memref<48x128xbf16, #tpu.memory_space<vmem>>, vector<48x38xbf16>
    %c384_42 = arith.constant 384 : index
    %c346 = arith.constant 346 : index
    %33 = vector.load %arg5[%c384_42, %c346] : memref<432x384xbf16, #tpu.memory_space<vmem>>, vector<48x38xbf16>
    tpu.vector_store %arg5[%c384_42, %c346], %32 {strides = array<i32>} : memref<432x384xbf16, #tpu.memory_space<vmem>>, vector<48x38xbf16>,
    %c0_43 = arith.constant 0 : index
    %c0_44 = arith.constant 0 : index
    %34 = vector.load %arg3[%c0_43, %c0_44] : memref<128x432xbf16, #tpu.memory_space<vmem>>, vector<128x432xbf16>
    %c0_45 = arith.constant 0 : index
    %c0_46 = arith.constant 0 : index
    %35 = vector.load %arg5[%c0_45, %c0_46] : memref<432x384xbf16, #tpu.memory_space<vmem>>, vector<432x384xbf16>
    %cst = arith.constant dense<0.000000e+00> : vector<128x384xf32>
    %36 = tpu.matmul %34, %35, %cst {dimension_numbers = #tpu.dot_dimension_numbers<[1], [0], [0], [1], [0, 0, 1, 1], [], []>} : vector<128x432xbf16>, vector<432x384xbf16>, vector<128x384xf32> -> vector<128x384xf32>
    %37 = vector.extract_strided_slice %36 {offsets = [0, 0], sizes = [32, 384], strides = [1, 1]} : vector<128x384xf32> to vector<32x384xf32>
    %38 = arith.negf %37 : vector<32x384xf32>
    %39 = math.exp %38 : vector<32x384xf32>
    %cst_47 = arith.constant 1.000000e+00 : f32
    %40 = vector.broadcast %cst_47 : f32 to vector<32x384xf32>
    %41 = arith.addf %40, %39 : vector<32x384xf32>
    %42 = arith.divf %40, %41 : vector<32x384xf32>
    %43 = vector.extract_strided_slice %36 {offsets = [32, 0], sizes = [32, 384], strides = [1, 1]} : vector<128x384xf32> to vector<32x384xf32>
    %44 = vector.extract_strided_slice %36 {offsets = [64, 0], sizes = [32, 384], strides = [1, 1]} : vector<128x384xf32> to vector<32x384xf32>
    %45 = arith.mulf %42, %44 : vector<32x384xf32>
    %46 = arith.addf %43, %45 : vector<32x384xf32>
    %47 = math.tanh %46 : vector<32x384xf32>
    %48 = vector.extract_strided_slice %36 {offsets = [96, 0], sizes = [32, 384], strides = [1, 1]} : vector<128x384xf32> to vector<32x384xf32>
    %49 = arith.subf %48, %47 : vector<32x384xf32>
    %50 = arith.mulf %42, %49 : vector<32x384xf32>
    %51 = arith.addf %47, %50 : vector<32x384xf32>
    %c0_48 = arith.constant 0 : index
    %c0_49 = arith.constant 0 : index
    %52 = vector.load %arg4[%c0_48, %c0_49] : memref<32x384xf32, #tpu.memory_space<vmem>>, vector<32x384xf32>
    tpu.vector_store %arg4[%c0_48, %c0_49], %51 {strides = array<i32>} : memref<32x384xf32, #tpu.memory_space<vmem>>, vector<32x384xf32>,
    return
  }
  func.func @transform_0(%arg0: i32) -> (i32, i32) {
    %c0_i32 = arith.constant 0 : i32
    %c0_i32_0 = arith.constant 0 : i32
    return %c0_i32, %arg0 : i32, i32
  }
  func.func @transform_1(%arg0: i32) -> (i32, i32) {
    %c0_i32 = arith.constant 0 : i32
    %c0_i32_0 = arith.constant 0 : i32
    return %c0_i32, %arg0 : i32, i32
  }
  func.func @transform_2(%arg0: i32) -> (i32, i32) {
    %c0_i32 = arith.constant 0 : i32
    %c0_i32_0 = arith.constant 0 : i32
    %c0_i32_1 = arith.constant 0 : i32
    return %c0_i32, %c0_i32_0 : i32, i32
  }
  func.func @transform_3(%arg0: i32) -> (i32, i32) {
    %c0_i32 = arith.constant 0 : i32
    %c0_i32_0 = arith.constant 0 : i32
    return %c0_i32, %arg0 : i32, i32
  }
}

</mosaic_0001>

<llo_original>
// kernel: conv_mgu_cell.1
$region0: #{conv_mgu_cell.1}
  #allocation0 [shape = 'u32[]', space=smem, size = 0x4, offset = 0x4, fixed_abs, tag = 'smem constant byte address 0x4 - core index']
  #allocation1 [shape = 'u32[144,128]{1,0:T(1,128)}', space=vmem, size = 0x12000, scoped, tag = 'internal scratch']
  #allocation2 [shape = 'bf16[432,384]{1,0:T(16,128)(2,1)}', space=vmem, size = 0x51000, scoped, tag = 'scratch operand']
  %s0 = inlined_call_operand.vmem [shape: bf16[48,768], index: 0, kind: input, shape index: {}]
  %s1 = inlined_call_operand.vmem [shape: bf16[48,256], index: 1, kind: input, shape index: {}]
  %s2 = inlined_call_operand.vmem [shape: bf16[128,432], index: 2, kind: input, shape index: {}]
  %s3 = inlined_call_operand.vmem [shape: f32[32,768], index: 3, kind: output, shape index: {}]
  %s4 = sld [smem:[#allocation0]]
  $region131: #{conv_mgu_cell.1} parent=0
    _
  %s6 = ssub.s32 1, %s4
  %s7 = scalar_select 0, %s6, %s4
  $region1: #{conv_mgu_cell.1} parent=0
    #allocation3 [shape = 'u8[73728]{0}', space=vmem, size = 0x12000, scoped, tag = 'input window, operand 0']
    #allocation4 [shape = 'u8[24576]{0}', space=vmem, size = 0x6000, scoped, tag = 'input window, operand 1']
    #allocation5 [shape = 'u8[98304]{0}', space=vmem, size = 0x18000, scoped, tag = 'output window, operand 0']
    loop: start=0, step=1, limit=4
    $region2: #{conv_mgu_cell.1} parent=1 // loop_pre_header
      _
    $region3: #{conv_mgu_cell.1} parent=1 // loop_header
      %s9 = sphi 0, %s13
      %p10 = scmp.ge.s32.totalorder %s9, 4
      %s19 = sphi 0, %s21
      %s22 = sphi 0, %s19
      %s23 = sphi 0, %s22
      %s39 = sphi 0, %s23
      %s45 = sphi 0, %s47
      %s48 = sphi 0, %s45
      %s49 = sphi 0, %s48
      %s65 = sphi 0, %s49
      %s69 = sphi 0, %s69
      %s71 = sphi 0, %s69
      %s72 = sphi 0, %s71
      %s86 = sphi 0, %s72
      %s92 = sphi 0, %s94
      %s95 = sphi 0, %s92
      %s96 = sphi 0, %s95
      %s112 = sphi 0, %s96
    $region4: #{conv_mgu_cell.1} parent=1 // loop_header_branch
      %12 = sbr.rel (%p10) target = $region8
    $region5: #{conv_mgu_cell.1} parent=1 // loop_body
      %s14 = ssub.s32 %s9, 1
      %s15 = ssub.s32 %s9, 2
      %s16 = sadd.s32 %s9, 1
      %s17 = ssub.s32 %s9, %s16
      %p18 = scmp.eq.s32.totalorder %s17, 0
      %s20 = sadd.s32 %s19, 1
      %s21 = scalar_select %p18, %s19, %s20
      %p24 = pneg %p18
      %p25 = scmp.eq.s32.totalorder %s9, 1
      %p26 = por %p24, %p25
      %p27 = scmp.ne.s32.totalorder %s19, %s22
      %p28 = scmp.eq.s32.totalorder %s9, 0
      %p29 = por %p27, %p28
      %p30 = scmp.ne.s32.totalorder %s19, %s22
      %p31 = scmp.eq.s32.totalorder %s14, 1
      %p32 = por %p30, %p31
      %p33 = scmp.ne.s32.totalorder %s22, %s23
      %p34 = scmp.eq.s32.totalorder %s14, 0
      %p35 = por %p33, %p34
      %p36 = scmp.ne.s32.totalorder %s22, %s23
      %p37 = scmp.eq.s32.totalorder %s15, 1
      %p38 = por %p36, %p37
      %p40 = scmp.ne.s32.totalorder %s23, %s39
      %p41 = scmp.eq.s32.totalorder %s15, 0
      %p42 = por %p40, %p41
      %s43 = ssub.s32 %s9, %s16
      %p44 = scmp.eq.s32.totalorder %s43, 0
      %s46 = sadd.s32 %s45, 1
      %s47 = scalar_select %p44, %s45, %s46
      %p50 = pneg %p44
      %p51 = scmp.eq.s32.totalorder %s9, 1
      %p52 = por %p50, %p51
      %p53 = scmp.ne.s32.totalorder %s45, %s48
      %p54 = scmp.eq.s32.totalorder %s9, 0
      %p55 = por %p53, %p54
      %p56 = scmp.ne.s32.totalorder %s45, %s48
      %p57 = scmp.eq.s32.totalorder %s14, 1
      %p58 = por %p56, %p57
      %p59 = scmp.ne.s32.totalorder %s48, %s49
      %p60 = scmp.eq.s32.totalorder %s14, 0
      %p61 = por %p59, %p60
      %p62 = scmp.ne.s32.totalorder %s48, %s49
      %p63 = scmp.eq.s32.totalorder %s15, 1
      %p64 = por %p62, %p63
      %p66 = scmp.ne.s32.totalorder %s49, %s65
      %p67 = scmp.eq.s32.totalorder %s15, 0
      %p68 = por %p66, %p67
      %s70 = sadd.s32 %s69, 1
      %p73 = scmp.eq.s32.totalorder %s9, 1
      %p74 = scmp.ne.s32.totalorder %s69, %s71
      %p75 = scmp.eq.s32.totalorder %s9, 0
      %p76 = por %p74, %p75
      %p77 = scmp.ne.s32.totalorder %s69, %s71
      %p78 = scmp.eq.s32.totalorder %s14, 1
      %p79 = por %p77, %p78
      %p80 = scmp.ne.s32.totalorder %s71, %s72
      %p81 = scmp.eq.s32.totalorder %s14, 0
      %p82 = por %p80, %p81
      %p83 = scmp.ne.s32.totalorder %s71, %s72
      %p84 = scmp.eq.s32.totalorder %s15, 1
      %p85 = por %p83, %p84
      %p87 = scmp.ne.s32.totalorder %s72, %s86
      %p88 = scmp.eq.s32.totalorder %s15, 0
      %p89 = por %p87, %p88
      %s90 = ssub.s32 %s9, %s16
      %p91 = scmp.eq.s32.totalorder %s90, 0
      %s93 = sadd.s32 %s92, 1
      %s94 = scalar_select %p91, %s92, %s93
      %p97 = pneg %p91
      %p98 = scmp.eq.s32.totalorder %s9, 1
      %p99 = por %p97, %p98
      %p100 = scmp.ne.s32.totalorder %s92, %s95
      %p101 = scmp.eq.s32.totalorder %s9, 0
      %p102 = por %p100, %p101
      %p103 = scmp.ne.s32.totalorder %s92, %s95
      %p104 = scmp.eq.s32.totalorder %s14, 1
      %p105 = por %p103, %p104
      %p106 = scmp.ne.s32.totalorder %s95, %s96
      %p107 = scmp.eq.s32.totalorder %s14, 0
      %p108 = por %p106, %p107
      %p109 = scmp.ne.s32.totalorder %s95, %s96
      %p110 = scmp.eq.s32.totalorder %s15, 1
      %p111 = por %p109, %p110
      %p113 = scmp.ne.s32.totalorder %s96, %s112
      %p114 = scmp.eq.s32.totalorder %s15, 0
      %p115 = por %p113, %p114
      %p116 = scmp.le.s32.totalorder 1, %s9
      %p117 = scmp.lt.s32.totalorder %s9, 3
      %p118 = pnand %p116, %p117
      %p119 = pneg %p118
      // Predicated region
      $region9: #{conv_mgu_cell.1} parent=5 // pred_check
        _
      $region10: #{conv_mgu_cell.1} parent=5 // pred_check_branch
        %121 = sbr.rel (%p118) target = $region12
      $region11: #{conv_mgu_cell.1} parent=5 // pred_region
        %s122 = ssub.s32 %s9, 1
        // Predicated region
        $region13: #{conv_mgu_cell.1} parent=11 // pred_check
          %p123 = pneg %p82
        $region14: #{conv_mgu_cell.1} parent=11 // pred_check_branch
          %125 = sbr.rel (%p123) target = $region16
        $region15: #{conv_mgu_cell.1} parent=11 // pred_region
          _
        $region16: #{conv_mgu_cell.1} parent=11 // pred_fallthru
          _
      $region12: #{conv_mgu_cell.1} parent=5 // pred_fallthru
        _
      %p126 = scmp.lt.s32.totalorder %s9, 2
      // Predicated region
      $region17: #{conv_mgu_cell.1} parent=5 // pred_check
        %p127 = pneg %p126
      $region18: #{conv_mgu_cell.1} parent=5 // pred_check_branch
        %129 = sbr.rel (%p127) target = $region20
      $region19: #{conv_mgu_cell.1} parent=5 // pred_region
        // Predicated region
        $region21: #{conv_mgu_cell.1} parent=19 // pred_check
          %p130 = pneg %p29
        $region22: #{conv_mgu_cell.1} parent=19 // pred_check_branch
          %132 = sbr.rel (%p130) target = $region24
        $region23: #{conv_mgu_cell.1} parent=19 // pred_region
          %s133 = sand.u32 %s19, 1
          %s134 = sand.u32 %s19, 1
          %s135 = smul.addr %s134, 72
          %s136 = scalar_lea.vmem [#allocation3], %s135
          %s137 = smul.u32 3, %s9
          %s138 = smul.addr %s137, 4
          %s139 = scalar_lea.vmem %s0, %s138
          // Predicated region
          $region25: #{conv_mgu_cell.1} parent=23 // pred_check
            _
          $region26: #{conv_mgu_cell.1} parent=23 // pred_check_branch
            %141 = sbr.rel (0) target = $region28
          $region27: #{conv_mgu_cell.1} parent=23 // pred_region
            // Predicated region
            $region29: #{conv_mgu_cell.1} parent=27 // pred_check
              _
            $region30: #{conv_mgu_cell.1} parent=27 // pred_check_branch
              %143 = sbr.rel (0) target = $region32
            $region31: #{conv_mgu_cell.1} parent=27 // pred_region
              %s144 = scalar_lea.vmem %s139, 8
              %s145 = scalar_lea.vmem %s136, 8 [#allocation3]
              loop: start=0, step=1, limit=1
              $region33: #{conv_mgu_cell.1} parent=31 // loop_pre_header
                _
              $region34: #{conv_mgu_cell.1} parent=31 // loop_header
                %s147 = sphi 0, %s151
                %p148 = scmp.ge.s32.totalorder %s147, 1
                %s152 = sphi %s139, %s139
                %s153 = sphi %s136, %s136
              $region35: #{conv_mgu_cell.1} parent=31 // loop_header_branch
                %150 = sbr.rel (%p148) target = $region39
              $region36: #{conv_mgu_cell.1} parent=31 // loop_body
                %v154 = vld [vmem:[%s152] sm:$0xff]
                %155 = vst [vmem:[%s153] sm:$0xff] %v154
                %v156 = vld [vmem:[%s152 + $0x18] sm:$0xff]
                %157 = vst [vmem:[%s153 + $0xc] sm:$0xff] %v156
                %v158 = vld [vmem:[%s152 + $0x30] sm:$0xff]
                %159 = vst [vmem:[%s153 + $0x18] sm:$0xff] %v158
                %v160 = vld [vmem:[%s152 + $0x48] sm:$0xff]
                %161 = vst [vmem:[%s153 + $0x24] sm:$0xff] %v160
                %v162 = vld [vmem:[%s152 + $0x60] sm:$0xff]
                %163 = vst [vmem:[%s153 + $0x30] sm:$0xff] %v162
                %v164 = vld [vmem:[%s152 + $0x78] sm:$0xff]
                %165 = vst [vmem:[%s153 + $0x3c] sm:$0xff] %v164
              $region37: #{conv_mgu_cell.1} parent=31 // loop_footer
                %s151 = sadd.s32 1, %s147
              $region38: #{conv_mgu_cell.1} parent=31 // loop_footer_branch
                %146 = sbr.rel target = $region34
              $region39: #{conv_mgu_cell.1} parent=31 // loop_exit
                _
              loop: start=0, step=1, limit=1
              $region40: #{conv_mgu_cell.1} parent=31 // loop_pre_header
                _
              $region41: #{conv_mgu_cell.1} parent=31 // loop_header
                %s168 = sphi 0, %s172
                %p169 = scmp.ge.s32.totalorder %s168, 1
                %s173 = sphi %s144, %s144
                %s174 = sphi %s145, %s145
              $region42: #{conv_mgu_cell.1} parent=31 // loop_header_branch
                %171 = sbr.rel (%p169) target = $region46
              $region43: #{conv_mgu_cell.1} parent=31 // loop_body
                %v175 = vld [vmem:[%s173] sm:$0xf]
                %176 = vst [vmem:[%s174] sm:$0xf] %v175
                %v177 = vld [vmem:[%s173 + $0x18] sm:$0xf]
                %178 = vst [vmem:[%s174 + $0xc] sm:$0xf] %v177
                %v179 = vld [vmem:[%s173 + $0x30] sm:$0xf]
                %180 = vst [vmem:[%s174 + $0x18] sm:$0xf] %v179
                %v181 = vld [vmem:[%s173 + $0x48] sm:$0xf]
                %182 = vst [vmem:[%s174 + $0x24] sm:$0xf] %v181
                %v183 = vld [vmem:[%s173 + $0x60] sm:$0xf]
                %184 = vst [vmem:[%s174 + $0x30] sm:$0xf] %v183
                %v185 = vld [vmem:[%s173 + $0x78] sm:$0xf]
                %186 = vst [vmem:[%s174 + $0x3c] sm:$0xf] %v185
              $region44: #{conv_mgu_cell.1} parent=31 // loop_footer
                %s172 = sadd.s32 1, %s168
              $region45: #{conv_mgu_cell.1} parent=31 // loop_footer_branch
                %167 = sbr.rel target = $region41
              $region46: #{conv_mgu_cell.1} parent=31 // loop_exit
                _
            $region32: #{conv_mgu_cell.1} parent=27 // pred_fallthru
              _
          $region28: #{conv_mgu_cell.1} parent=23 // pred_fallthru
            _
          %187 = vnop
        $region24: #{conv_mgu_cell.1} parent=19 // pred_fallthru
          _
        // Predicated region
        $region47: #{conv_mgu_cell.1} parent=19 // pred_check
          %p188 = pneg %p55
        $region48: #{conv_mgu_cell.1} parent=19 // pred_check_branch
          %190 = sbr.rel (%p188) target = $region50
        $region49: #{conv_mgu_cell.1} parent=19 // pred_region
          %s191 = sand.u32 %s45, 1
          %s192 = sand.u32 %s45, 1
          %s193 = smul.addr %s192, 24
          %s194 = scalar_lea.vmem [#allocation4], %s193
          %s195 = smul.addr %s9, 4
          %s196 = scalar_lea.vmem %s1, %s195
          // Predicated region
          $region51: #{conv_mgu_cell.1} parent=49 // pred_check
            _
          $region52: #{conv_mgu_cell.1} parent=49 // pred_check_branch
            %198 = sbr.rel (0) target = $region54
          $region53: #{conv_mgu_cell.1} parent=49 // pred_region
            // Predicated region
            $region55: #{conv_mgu_cell.1} parent=53 // pred_check
              _
            $region56: #{conv_mgu_cell.1} parent=53 // pred_check_branch
              %200 = sbr.rel target = $region58
            $region57: #{conv_mgu_cell.1} parent=53 // pred_region
              // Predicated region
              $region70: #{conv_mgu_cell.1} parent=57 // pred_check
                _
              $region71: #{conv_mgu_cell.1} parent=57 // pred_check_branch
                %225 = sbr.rel (0) target = $region73
              $region72: #{conv_mgu_cell.1} parent=57 // pred_region
                loop: start=0, step=1, limit=1
                $region74: #{conv_mgu_cell.1} parent=72 // loop_pre_header
                  _
                $region75: #{conv_mgu_cell.1} parent=72 // loop_header
                  %s227 = sphi 0, %s231
                  %p228 = scmp.ge.s32.totalorder %s227, 1
                  %s232 = sphi %s196, %s196
                  %s233 = sphi %s194, %s194
                $region76: #{conv_mgu_cell.1} parent=72 // loop_header_branch
                  %230 = sbr.rel (%p228) target = $region80
                $region77: #{conv_mgu_cell.1} parent=72 // loop_body
                  _
                $region78: #{conv_mgu_cell.1} parent=72 // loop_footer
                  %s231 = sadd.s32 1, %s227
                $region79: #{conv_mgu_cell.1} parent=72 // loop_footer_branch
                  %226 = sbr.rel target = $region75
                $region80: #{conv_mgu_cell.1} parent=72 // loop_exit
                  _
                loop: start=0, step=1, limit=1
                $region81: #{conv_mgu_cell.1} parent=72 // loop_pre_header
                  _
                $region82: #{conv_mgu_cell.1} parent=72 // loop_header
                  %s236 = sphi 0, %s240
                  %p237 = scmp.ge.s32.totalorder %s236, 1
                  %s241 = sphi %s196, %s196
                  %s242 = sphi %s194, %s194
                $region83: #{conv_mgu_cell.1} parent=72 // loop_header_branch
                  %239 = sbr.rel (%p237) target = $region87
                $region84: #{conv_mgu_cell.1} parent=72 // loop_body
                  %v243 = vld [vmem:[%s241] sm:$0xf]
                  %244 = vst [vmem:[%s242] sm:$0xf] %v243
                  %v245 = vld [vmem:[%s241 + $0x8] sm:$0xf]
                  %246 = vst [vmem:[%s242 + $0x4] sm:$0xf] %v245
                  %v247 = vld [vmem:[%s241 + $0x10] sm:$0xf]
                  %248 = vst [vmem:[%s242 + $0x8] sm:$0xf] %v247
                  %v249 = vld [vmem:[%s241 + $0x18] sm:$0xf]
                  %250 = vst [vmem:[%s242 + $0xc] sm:$0xf] %v249
                  %v251 = vld [vmem:[%s241 + $0x20] sm:$0xf]
                  %252 = vst [vmem:[%s242 + $0x10] sm:$0xf] %v251
                  %v253 = vld [vmem:[%s241 + $0x28] sm:$0xf]
                  %254 = vst [vmem:[%s242 + $0x14] sm:$0xf] %v253
                $region85: #{conv_mgu_cell.1} parent=72 // loop_footer
                  %s240 = sadd.s32 1, %s236
                $region86: #{conv_mgu_cell.1} parent=72 // loop_footer_branch
                  %235 = sbr.rel target = $region82
                $region87: #{conv_mgu_cell.1} parent=72 // loop_exit
                  _
              $region73: #{conv_mgu_cell.1} parent=57 // pred_fallthru
                _
            $region58: #{conv_mgu_cell.1} parent=53 // pred_fallthru
              _
            // Predicated region
            $region59: #{conv_mgu_cell.1} parent=53 // pred_check
              _
            $region60: #{conv_mgu_cell.1} parent=53 // pred_check_branch
              %202 = sbr.rel (0) target = $region62
            $region61: #{conv_mgu_cell.1} parent=53 // pred_region
              loop: start=0, step=1, limit=1
              $region63: #{conv_mgu_cell.1} parent=61 // loop_pre_header
                _
              $region64: #{conv_mgu_cell.1} parent=61 // loop_header
                %s205 = sphi 0, %s209
                %p206 = scmp.ge.s32.totalorder %s205, 1
                %s210 = sphi %s196, %s196
                %s211 = sphi %s194, %s194
              $region65: #{conv_mgu_cell.1} parent=61 // loop_header_branch
                %208 = sbr.rel (%p206) target = $region69
              $region66: #{conv_mgu_cell.1} parent=61 // loop_body
                %v212 = vld [vmem:[%s210] sm:$0xf]
                %213 = vst [vmem:[%s211] sm:$0xf] %v212
                %v214 = vld [vmem:[%s210 + $0x8] sm:$0xf]
                %215 = vst [vmem:[%s211 + $0x4] sm:$0xf] %v214
                %v216 = vld [vmem:[%s210 + $0x10] sm:$0xf]
                %217 = vst [vmem:[%s211 + $0x8] sm:$0xf] %v216
                %v218 = vld [vmem:[%s210 + $0x18] sm:$0xf]
                %219 = vst [vmem:[%s211 + $0xc] sm:$0xf] %v218
                %v220 = vld [vmem:[%s210 + $0x20] sm:$0xf]
                %221 = vst [vmem:[%s211 + $0x10] sm:$0xf] %v220
                %v222 = vld [vmem:[%s210 + $0x28] sm:$0xf]
                %223 = vst [vmem:[%s211 + $0x14] sm:$0xf] %v222
              $region67: #{conv_mgu_cell.1} parent=61 // loop_footer
                %s209 = sadd.s32 1, %s205
              $region68: #{conv_mgu_cell.1} parent=61 // loop_footer_branch
                %204 = sbr.rel target = $region64
              $region69: #{conv_mgu_cell.1} parent=61 // loop_exit
                _
            $region62: #{conv_mgu_cell.1} parent=53 // pred_fallthru
              _
          $region54: #{conv_mgu_cell.1} parent=49 // pred_fallthru
            _
          %255 = vnop
        $region50: #{conv_mgu_cell.1} parent=19 // pred_fallthru
          _
      $region20: #{conv_mgu_cell.1} parent=5 // pred_fallthru
        _
      %p256 = scmp.le.s32.totalorder 1, %s9
      %p257 = scmp.lt.s32.totalorder %s9, 3
      %p258 = pnand %p256, %p257
      %p259 = pneg %p258
      // Predicated region
      $region88: #{conv_mgu_cell.1} parent=5 // pred_check
        _
      $region89: #{conv_mgu_cell.1} parent=5 // pred_check_branch
        %261 = sbr.rel (%p258) target = $region91
      $region90: #{conv_mgu_cell.1} parent=5 // pred_region
        %s262 = ssub.s32 %s9, 1
        %s263 = sand.u32 %s22, 1
        %s264 = sand.u32 %s22, 1
        %s265 = smul.addr %s264, 72
        %s266 = scalar_lea.vmem [#allocation3], %s265
        // Predicated region
        $region92: #{conv_mgu_cell.1} parent=90 // pred_check
          %p267 = pneg %p35
        $region93: #{conv_mgu_cell.1} parent=90 // pred_check_branch
          %269 = sbr.rel (%p267) target = $region95
        $region94: #{conv_mgu_cell.1} parent=90 // pred_region
          _
        $region95: #{conv_mgu_cell.1} parent=90 // pred_fallthru
          _
        %s270 = sand.u32 %s48, 1
        %s271 = sand.u32 %s48, 1
        %s272 = smul.addr %s271, 24
        %s273 = scalar_lea.vmem [#allocation4], %s272
        // Predicated region
        $region96: #{conv_mgu_cell.1} parent=90 // pred_check
          %p274 = pneg %p61
        $region97: #{conv_mgu_cell.1} parent=90 // pred_check_branch
          %276 = sbr.rel (%p274) target = $region99
        $region98: #{conv_mgu_cell.1} parent=90 // pred_region
          _
        $region99: #{conv_mgu_cell.1} parent=90 // pred_fallthru
          _
        %s277 = sand.u32 %s22, 1
        %s278 = sand.u32 %s22, 1
        %s279 = smul.addr %s278, 72
        %s280 = scalar_lea.vmem [#allocation3], %s279
        %p281 = pneg %p35
        %p282 = pneg %p32
        %s283 = sand.u32 %s48, 1
        %s284 = sand.u32 %s48, 1
        %s285 = smul.addr %s284, 24
        %s286 = scalar_lea.vmem [#allocation4], %s285
        %p287 = pneg %p61
        %p288 = pneg %p58
        %p289 = pneg %p82
        %p290 = pneg %p79
        %p291 = pneg %p108
        %p292 = pneg %p105
        %s293 = sand.u32 %s95, 1
        %s294 = sand.u32 %s95, 1
        %s295 = smul.addr %s294, 96
        %s296 = scalar_lea.vmem [#allocation5], %s295
        %s297 = smul.u32 3, %s14
        %s298 = smul.u32 3, %s14
        %v300 = vld [vmem:[%s266] sm:$0xff]
        %v301 = vld [vmem:[%s266 + $0x8] sm:$0xf]
        %v302 = vld [vmem:[%s266 + $0xc] sm:$0xff]
        %v303 = vld [vmem:[%s266 + $0x14] sm:$0xf]
        %v304 = vld [vmem:[%s266 + $0x18] sm:$0xff]
        %v305 = vld [vmem:[%s266 + $0x20] sm:$0xf]
        %v306 = vld [vmem:[%s266 + $0x24] sm:$0xff]
        %v307 = vld [vmem:[%s266 + $0x2c] sm:$0xf]
        %v308 = vld [vmem:[%s266 + $0x30] sm:$0xff]
        %v309 = vld [vmem:[%s266 + $0x38] sm:$0xf]
        %v310 = vld [vmem:[%s266 + $0x3c] sm:$0xff]
        %v311 = vld [vmem:[%s266 + $0x44] sm:$0xf]
        %v324 = vunpack.c.l.b16 %v300
        %v325 = vunpack.c.h.b16 %v300
        %v326 = vunpack.c.l.b16 %v301
        %v327 = vunpack.c.l.b16 %v302
        %v328 = vunpack.c.h.b16 %v302
        %v329 = vunpack.c.l.b16 %v303
        %v330 = vunpack.c.l.b16 %v304
        %v331 = vunpack.c.h.b16 %v304
        %v332 = vunpack.c.l.b16 %v305
        %v333 = vunpack.c.l.b16 %v306
        %v334 = vunpack.c.h.b16 %v306
        %v335 = vunpack.c.l.b16 %v307
        %v336 = vunpack.c.l.b16 %v308
        %v337 = vunpack.c.h.b16 %v308
        %v338 = vunpack.c.l.b16 %v309
        %v339 = vunpack.c.l.b16 %v310
        %v340 = vunpack.c.h.b16 %v310
        %v341 = vunpack.c.l.b16 %v311
        %v342 = vpack.c.b16 %v327, %v324
        %v343 = vpack.c.b16 %v328, %v325
        %v344 = vpack.c.b16 %v329, %v326
        %v345 = vpack.c.b16 %v333, %v330
        %v346 = vpack.c.b16 %v334, %v331
        %v347 = vpack.c.b16 %v335, %v332
        %v348 = vpack.c.b16 %v339, %v336
        %v349 = vpack.c.b16 %v340, %v337
        %v350 = vpack.c.b16 %v341, %v338
        %360 = vst [vmem:[#allocation2] sm:$0xff] %v342
        %361 = vst [vmem:[#allocation2 + $0x8] sm:$0xff] %v343
        %362 = vst [vmem:[#allocation2 + $0x10] sm:$0xff] %v344
        %363 = vst [vmem:[#allocation2 + $0x18] sm:$0xff] %v345
        %364 = vst [vmem:[#allocation2 + $0x20] sm:$0xff] %v346
        %365 = vst [vmem:[#allocation2 + $0x28] sm:$0xff] %v347
        %366 = vst [vmem:[#allocation2 + $0x30] sm:$0xff] %v348
        %367 = vst [vmem:[#allocation2 + $0x38] sm:$0xff] %v349
        %368 = vst [vmem:[#allocation2 + $0x40] sm:$0xff] %v350
        %v369 = vld [vmem:[%s266] sm:$0xff]
        %v370 = vld [vmem:[%s266 + $0x8] sm:$0xf]
        %v371 = vld [vmem:[%s266 + $0xc] sm:$0xff]
        %v372 = vld [vmem:[%s266 + $0x14] sm:$0xf]
        %v373 = vld [vmem:[%s266 + $0x18] sm:$0xff]
        %v374 = vld [vmem:[%s266 + $0x20] sm:$0xf]
        %v375 = vld [vmem:[%s266 + $0x24] sm:$0xff]
        %v376 = vld [vmem:[%s266 + $0x2c] sm:$0xf]
        %v377 = vld [vmem:[%s266 + $0x30] sm:$0xff]
        %v378 = vld [vmem:[%s266 + $0x38] sm:$0xf]
        %v379 = vld [vmem:[%s266 + $0x3c] sm:$0xff]
        %v380 = vld [vmem:[%s266 + $0x44] sm:$0xf]
        %v393 = vunpack.c.l.b16 %v369
        %v394 = vunpack.c.h.b16 %v369
        %v395 = vunpack.c.l.b16 %v370
        %v396 = vunpack.c.l.b16 %v371
        %v397 = vunpack.c.h.b16 %v371
        %v398 = vunpack.c.l.b16 %v372
        %v399 = vunpack.c.l.b16 %v373
        %v400 = vunpack.c.h.b16 %v373
        %v401 = vunpack.c.l.b16 %v374
        %v402 = vunpack.c.l.b16 %v375
        %v403 = vunpack.c.h.b16 %v375
        %v404 = vunpack.c.l.b16 %v376
        %v405 = vunpack.c.l.b16 %v377
        %v406 = vunpack.c.h.b16 %v377
        %v407 = vunpack.c.l.b16 %v378
        %v408 = vunpack.c.l.b16 %v379
        %v409 = vunpack.c.h.b16 %v379
        %v410 = vunpack.c.l.b16 %v380
        %v411 = vpack.c.b16 %v396, %v393
        %v412 = vpack.c.b16 %v397, %v394
        %v413 = vpack.c.b16 %v398, %v395
        %v414 = vpack.c.b16 %v402, %v399
        %v415 = vpack.c.b16 %v403, %v400
        %v416 = vpack.c.b16 %v404, %v401
        %v417 = vpack.c.b16 %v408, %v405
        %v418 = vpack.c.b16 %v409, %v406
        %v419 = vpack.c.b16 %v410, %v407
        %420 = vrot.lane.b32.xlu0 %v411, 127
        %v421 = vpop.permute.xlu0 %420
        %422 = vrot.lane.b32.xlu0 %v412, 127
        %v423 = vpop.permute.xlu0 %422
        %424 = vrot.lane.b32.xlu0 %v413, 127
        %v425 = vpop.permute.xlu0 %424
        %426 = vrot.lane.b32.xlu0 %v414, 127
        %v427 = vpop.permute.xlu0 %426
        %428 = vrot.lane.b32.xlu0 %v415, 127
        %v429 = vpop.permute.xlu0 %428
        %430 = vrot.lane.b32.xlu0 %v416, 127
        %v431 = vpop.permute.xlu0 %430
        %432 = vrot.lane.b32.xlu0 %v417, 127
        %v433 = vpop.permute.xlu0 %432
        %434 = vrot.lane.b32.xlu0 %v418, 127
        %v435 = vpop.permute.xlu0 %434
        %436 = vrot.lane.b32.xlu0 %v419, 127
        %v437 = vpop.permute.xlu0 %436
        %vm438 = vcmask 1039360
        %v439 = vsel %vm438, %v421, %v423
        %v440 = vsel %vm438, %v423, %v425
        %v441 = vsel %vm438, %v427, %v429
        %v442 = vsel %vm438, %v429, %v431
        %v443 = vsel %vm438, %v433, %v435
        %v444 = vsel %vm438, %v435, %v437
        %454 = vst [vmem:[#allocation2 + $0x48] sm:$0xff] %v439
        %455 = vst [vmem:[#allocation2 + $0x50] sm:$0xff] %v440
        %vm456 = vcmask 1039360
        %457 = vst.msk [vmem:[#allocation2 + $0x58] sm:$0xff] %vm456, %v425
        %458 = vst [vmem:[#allocation2 + $0x60] sm:$0xff] %v441
        %459 = vst [vmem:[#allocation2 + $0x68] sm:$0xff] %v442
        %460 = vst.msk [vmem:[#allocation2 + $0x70] sm:$0xff] %vm456, %v431
        %461 = vst [vmem:[#allocation2 + $0x78] sm:$0xff] %v443
        %462 = vst [vmem:[#allocation2 + $0x80] sm:$0xff] %v444
        %463 = vst.msk [vmem:[#allocation2 + $0x88] sm:$0xff] %vm456, %v437
        %v464 = vld [vmem:[%s273] sm:$0xf]
        %v465 = vld [vmem:[%s273 + $0x4] sm:$0xf]
        %v466 = vld [vmem:[%s273 + $0x8] sm:$0xf]
        %v467 = vld [vmem:[%s273 + $0xc] sm:$0xf]
        %v468 = vld [vmem:[%s273 + $0x10] sm:$0xf]
        %v469 = vld [vmem:[%s273 + $0x14] sm:$0xf]
        %v476 = vunpack.c.l.b16 %v464
        %v477 = vunpack.c.l.b16 %v465
        %v478 = vunpack.c.l.b16 %v466
        %v479 = vunpack.c.l.b16 %v467
        %v480 = vunpack.c.l.b16 %v468
        %v481 = vunpack.c.l.b16 %v469
        %v482 = vpack.c.b16 %v477, %v476
        %v483 = vpack.c.b16 %v479, %v478
        %v484 = vpack.c.b16 %v481, %v480
        %485 = vrot.lane.b32.xlu0 %v482, 127
        %v486 = vpop.permute.xlu0 %485
        %487 = vrot.lane.b32.xlu0 %v483, 127
        %v488 = vpop.permute.xlu0 %487
        %489 = vrot.lane.b32.xlu0 %v484, 127
        %v490 = vpop.permute.xlu0 %489
        %vm494 = vcmask 1048568
        %495 = vst.msk [vmem:[#allocation2 + $0x58] sm:$0xff] %vm494, %v486
        %496 = vst.msk [vmem:[#allocation2 + $0x70] sm:$0xff] %vm494, %v488
        %497 = vst.msk [vmem:[#allocation2 + $0x88] sm:$0xff] %vm494, %v490
        %v498 = vld [vmem:[%s266] sm:$0xff]
        %v499 = vld [vmem:[%s266 + $0x8] sm:$0xf]
        %v500 = vld [vmem:[%s266 + $0xc] sm:$0xff]
        %v501 = vld [vmem:[%s266 + $0x14] sm:$0xf]
        %v502 = vld [vmem:[%s266 + $0x18] sm:$0xff]
        %v503 = vld [vmem:[%s266 + $0x20] sm:$0xf]
        %v504 = vld [vmem:[%s266 + $0x24] sm:$0xff]
        %v505 = vld [vmem:[%s266 + $0x2c] sm:$0xf]
        %v506 = vld [vmem:[%s266 + $0x30] sm:$0xff]
        %v507 = vld [vmem:[%s266 + $0x38] sm:$0xf]
        %v508 = vld [vmem:[%s266 + $0x3c] sm:$0xff]
        %v509 = vld [vmem:[%s266 + $0x44] sm:$0xf]
        %v522 = vunpack.c.l.b16 %v498
        %v523 = vunpack.c.h.b16 %v498
        %v524 = vunpack.c.l.b16 %v499
        %v525 = vunpack.c.l.b16 %v500
        %v526 = vunpack.c.h.b16 %v500
        %v527 = vunpack.c.l.b16 %v501
        %v528 = vunpack.c.l.b16 %v502
        %v529 = vunpack.c.h.b16 %v502
        %v530 = vunpack.c.l.b16 %v503
        %v531 = vunpack.c.l.b16 %v504
        %v532 = vunpack.c.h.b16 %v504
        %v533 = vunpack.c.l.b16 %v505
        %v534 = vunpack.c.l.b16 %v506
        %v535 = vunpack.c.h.b16 %v506
        %v536 = vunpack.c.l.b16 %v507
        %v537 = vunpack.c.l.b16 %v508
        %v538 = vunpack.c.h.b16 %v508
        %v539 = vunpack.c.l.b16 %v509
        %v540 = vpack.c.b16 %v525, %v522
        %v541 = vpack.c.b16 %v526, %v523
        %v542 = vpack.c.b16 %v527, %v524
        %v543 = vpack.c.b16 %v531, %v528
        %v544 = vpack.c.b16 %v532, %v529
        %v545 = vpack.c.b16 %v533, %v530
        %v546 = vpack.c.b16 %v537, %v534
        %v547 = vpack.c.b16 %v538, %v535
        %v548 = vpack.c.b16 %v539, %v536
        %549 = vrot.lane.b32.xlu0 %v540, 126
        %v550 = vpop.permute.xlu0 %549
        %551 = vrot.lane.b32.xlu0 %v541, 126
        %v552 = vpop.permute.xlu0 %551
        %553 = vrot.lane.b32.xlu0 %v542, 126
        %v554 = vpop.permute.xlu0 %553
        %555 = vrot.lane.b32.xlu0 %v543, 126
        %v556 = vpop.permute.xlu0 %555
        %557 = vrot.lane.b32.xlu0 %v544, 126
        %v558 = vpop.permute.xlu0 %557
        %559 = vrot.lane.b32.xlu0 %v545, 126
        %v560 = vpop.permute.xlu0 %559
        %561 = vrot.lane.b32.xlu0 %v546, 126
        %v562 = vpop.permute.xlu0 %561
        %563 = vrot.lane.b32.xlu0 %v547, 126
        %v564 = vpop.permute.xlu0 %563
        %565 = vrot.lane.b32.xlu0 %v548, 126
        %v566 = vpop.permute.xlu0 %565
        %vm567 = vcmask 1031168
        %v568 = vsel %vm567, %v550, %v552
        %v569 = vsel %vm567, %v552, %v554
        %v570 = vsel %vm567, %v556, %v558
        %v571 = vsel %vm567, %v558, %v560
        %v572 = vsel %vm567, %v562, %v564
        %v573 = vsel %vm567, %v564, %v566
        %583 = vst [vmem:[#allocation2 + $0x90] sm:$0xff] %v568
        %584 = vst [vmem:[#allocation2 + $0x98] sm:$0xff] %v569
        %vm585 = vcmask 1031168
        %586 = vst.msk [vmem:[#allocation2 + $0xa0] sm:$0xff] %vm585, %v554
        %587 = vst [vmem:[#allocation2 + $0xa8] sm:$0xff] %v570
        %588 = vst [vmem:[#allocation2 + $0xb0] sm:$0xff] %v571
        %589 = vst.msk [vmem:[#allocation2 + $0xb8] sm:$0xff] %vm585, %v560
        %590 = vst [vmem:[#allocation2 + $0xc0] sm:$0xff] %v572
        %591 = vst [vmem:[#allocation2 + $0xc8] sm:$0xff] %v573
        %592 = vst.msk [vmem:[#allocation2 + $0xd0] sm:$0xff] %vm585, %v566
        %v593 = vld [vmem:[%s273] sm:$0xf]
        %v594 = vld [vmem:[%s273 + $0x4] sm:$0xf]
        %v595 = vld [vmem:[%s273 + $0x8] sm:$0xf]
        %v596 = vld [vmem:[%s273 + $0xc] sm:$0xf]
        %v597 = vld [vmem:[%s273 + $0x10] sm:$0xf]
        %v598 = vld [vmem:[%s273 + $0x14] sm:$0xf]
        %v605 = vunpack.c.l.b16 %v593
        %v606 = vunpack.c.l.b16 %v594
        %v607 = vunpack.c.l.b16 %v595
        %v608 = vunpack.c.l.b16 %v596
        %v609 = vunpack.c.l.b16 %v597
        %v610 = vunpack.c.l.b16 %v598
        %v611 = vpack.c.b16 %v606, %v605
        %v612 = vpack.c.b16 %v608, %v607
        %v613 = vpack.c.b16 %v610, %v609
        %614 = vrot.lane.b32.xlu0 %v611, 126
        %v615 = vpop.permute.xlu0 %614
        %616 = vrot.lane.b32.xlu0 %v612, 126
        %v617 = vpop.permute.xlu0 %616
        %618 = vrot.lane.b32.xlu0 %v613, 126
        %v619 = vpop.permute.xlu0 %618
        %vm623 = vcmask 1048560
        %624 = vst.msk [vmem:[#allocation2 + $0xa0] sm:$0xff] %vm623, %v615
        %625 = vst.msk [vmem:[#allocation2 + $0xb8] sm:$0xff] %vm623, %v617
        %626 = vst.msk [vmem:[#allocation2 + $0xd0] sm:$0xff] %vm623, %v619
        %v627 = vld [vmem:[%s266] sm:$0xff]
        %v628 = vld [vmem:[%s266 + $0x8] sm:$0xf]
        %v629 = vld [vmem:[%s266 + $0xc] sm:$0xff]
        %v630 = vld [vmem:[%s266 + $0x14] sm:$0xf]
        %v631 = vld [vmem:[%s266 + $0x18] sm:$0xff]
        %v632 = vld [vmem:[%s266 + $0x20] sm:$0xf]
        %v633 = vld [vmem:[%s266 + $0x24] sm:$0xff]
        %v634 = vld [vmem:[%s266 + $0x2c] sm:$0xf]
        %v635 = vld [vmem:[%s266 + $0x30] sm:$0xff]
        %v636 = vld [vmem:[%s266 + $0x38] sm:$0xf]
        %v637 = vld [vmem:[%s266 + $0x3c] sm:$0xff]
        %v638 = vld [vmem:[%s266 + $0x44] sm:$0xf]
        %v651 = vunpack.c.l.b16 %v627
        %v652 = vunpack.c.h.b16 %v627
        %v653 = vunpack.c.l.b16 %v628
        %v654 = vunpack.c.l.b16 %v629
        %v655 = vunpack.c.h.b16 %v629
        %v656 = vunpack.c.l.b16 %v630
        %v657 = vunpack.c.l.b16 %v631
        %v658 = vunpack.c.h.b16 %v631
        %v659 = vunpack.c.l.b16 %v632
        %v660 = vunpack.c.l.b16 %v633
        %v661 = vunpack.c.h.b16 %v633
        %v662 = vunpack.c.l.b16 %v634
        %v663 = vunpack.c.l.b16 %v635
        %v664 = vunpack.c.h.b16 %v635
        %v665 = vunpack.c.l.b16 %v636
        %v666 = vunpack.c.l.b16 %v637
        %v667 = vunpack.c.h.b16 %v637
        %v668 = vunpack.c.l.b16 %v638
        %v669 = vpack.c.b16 %v654, %v651
        %v670 = vpack.c.b16 %v655, %v652
        %v671 = vpack.c.b16 %v656, %v653
        %v672 = vpack.c.b16 %v660, %v657
        %v673 = vpack.c.b16 %v661, %v658
        %v674 = vpack.c.b16 %v662, %v659
        %v675 = vpack.c.b16 %v666, %v663
        %v676 = vpack.c.b16 %v667, %v664
        %v677 = vpack.c.b16 %v668, %v665
        %678 = vrot.lane.b32.xlu0 %v669, 110
        %v679 = vpop.permute.xlu0 %678
        %680 = vrot.lane.b32.xlu0 %v670, 110
        %v681 = vpop.permute.xlu0 %680
        %682 = vrot.lane.b32.xlu0 %v671, 110
        %v683 = vpop.permute.xlu0 %682
        %684 = vrot.lane.b32.xlu0 %v672, 110
        %v685 = vpop.permute.xlu0 %684
        %686 = vrot.lane.b32.xlu0 %v673, 110
        %v687 = vpop.permute.xlu0 %686
        %688 = vrot.lane.b32.xlu0 %v674, 110
        %v689 = vpop.permute.xlu0 %688
        %690 = vrot.lane.b32.xlu0 %v675, 110
        %v691 = vpop.permute.xlu0 %690
        %692 = vrot.lane.b32.xlu0 %v676, 110
        %v693 = vpop.permute.xlu0 %692
        %694 = vrot.lane.b32.xlu0 %v677, 110
        %v695 = vpop.permute.xlu0 %694
        %vm696 = vcmask 900096
        %v697 = vsel %vm696, %v679, %v681
        %v698 = vsel %vm696, %v681, %v683
        %v699 = vsel %vm696, %v685, %v687
        %v700 = vsel %vm696, %v687, %v689
        %v701 = vsel %vm696, %v691, %v693
        %v702 = vsel %vm696, %v693, %v695
        %712 = vst [vmem:[#allocation2 + $0xd8] sm:$0xff] %v697
        %713 = vst [vmem:[#allocation2 + $0xe0] sm:$0xff] %v698
        %vm714 = vcmask 900096
        %715 = vst.msk [vmem:[#allocation2 + $0xe8] sm:$0xff] %vm714, %v683
        %716 = vst [vmem:[#allocation2 + $0xf0] sm:$0xff] %v699
        %717 = vst [vmem:[#allocation2 + $0xf8] sm:$0xff] %v700
        %718 = vst.msk [vmem:[#allocation2 + $0x100] sm:$0xff] %vm714, %v689
        %719 = vst [vmem:[#allocation2 + $0x108] sm:$0xff] %v701
        %720 = vst [vmem:[#allocation2 + $0x110] sm:$0xff] %v702
        %721 = vst.msk [vmem:[#allocation2 + $0x118] sm:$0xff] %vm714, %v695
        %v722 = vld [vmem:[%s273] sm:$0xf]
        %v723 = vld [vmem:[%s273 + $0x4] sm:$0xf]
        %v724 = vld [vmem:[%s273 + $0x8] sm:$0xf]
        %v725 = vld [vmem:[%s273 + $0xc] sm:$0xf]
        %v726 = vld [vmem:[%s273 + $0x10] sm:$0xf]
        %v727 = vld [vmem:[%s273 + $0x14] sm:$0xf]
        %v734 = vunpack.c.l.b16 %v722
        %v735 = vunpack.c.l.b16 %v723
        %v736 = vunpack.c.l.b16 %v724
        %v737 = vunpack.c.l.b16 %v725
        %v738 = vunpack.c.l.b16 %v726
        %v739 = vunpack.c.l.b16 %v727
        %v740 = vpack.c.b16 %v735, %v734
        %v741 = vpack.c.b16 %v737, %v736
        %v742 = vpack.c.b16 %v739, %v738
        %743 = vrot.lane.b32.xlu0 %v740, 110
        %v744 = vpop.permute.xlu0 %743
        %745 = vrot.lane.b32.xlu0 %v741, 110
        %v746 = vpop.permute.xlu0 %745
        %747 = vrot.lane.b32.xlu0 %v742, 110
        %v748 = vpop.permute.xlu0 %747
        %vm752 = vcmask 1048432
        %753 = vst.msk [vmem:[#allocation2 + $0xe8] sm:$0xff] %vm752, %v744
        %754 = vst.msk [vmem:[#allocation2 + $0x100] sm:$0xff] %vm752, %v746
        %755 = vst.msk [vmem:[#allocation2 + $0x118] sm:$0xff] %vm752, %v748
        %v756 = vld [vmem:[%s266] sm:$0xff]
        %v757 = vld [vmem:[%s266 + $0x8] sm:$0xf]
        %v758 = vld [vmem:[%s266 + $0xc] sm:$0xff]
        %v759 = vld [vmem:[%s266 + $0x14] sm:$0xf]
        %v760 = vld [vmem:[%s266 + $0x18] sm:$0xff]
        %v761 = vld [vmem:[%s266 + $0x20] sm:$0xf]
        %v762 = vld [vmem:[%s266 + $0x24] sm:$0xff]
        %v763 = vld [vmem:[%s266 + $0x2c] sm:$0xf]
        %v764 = vld [vmem:[%s266 + $0x30] sm:$0xff]
        %v765 = vld [vmem:[%s266 + $0x38] sm:$0xf]
        %v766 = vld [vmem:[%s266 + $0x3c] sm:$0xff]
        %v767 = vld [vmem:[%s266 + $0x44] sm:$0xf]
        %v780 = vunpack.c.l.b16 %v756
        %v781 = vunpack.c.h.b16 %v756
        %v782 = vunpack.c.l.b16 %v757
        %v783 = vunpack.c.l.b16 %v758
        %v784 = vunpack.c.h.b16 %v758
        %v785 = vunpack.c.l.b16 %v759
        %v786 = vunpack.c.l.b16 %v760
        %v787 = vunpack.c.h.b16 %v760
        %v788 = vunpack.c.l.b16 %v761
        %v789 = vunpack.c.l.b16 %v762
        %v790 = vunpack.c.h.b16 %v762
        %v791 = vunpack.c.l.b16 %v763
        %v792 = vunpack.c.l.b16 %v764
        %v793 = vunpack.c.h.b16 %v764
        %v794 = vunpack.c.l.b16 %v765
        %v795 = vunpack.c.l.b16 %v766
        %v796 = vunpack.c.h.b16 %v766
        %v797 = vunpack.c.l.b16 %v767
        %v798 = vpack.c.b16 %v783, %v780
        %v799 = vpack.c.b16 %v784, %v781
        %v800 = vpack.c.b16 %v785, %v782
        %v801 = vpack.c.b16 %v789, %v786
        %v802 = vpack.c.b16 %v790, %v787
        %v803 = vpack.c.b16 %v791, %v788
        %v804 = vpack.c.b16 %v795, %v792
        %v805 = vpack.c.b16 %v796, %v793
        %v806 = vpack.c.b16 %v797, %v794
        %807 = vrot.lane.b32.xlu0 %v798, 109
        %v808 = vpop.permute.xlu0 %807
        %809 = vrot.lane.b32.xlu0 %v799, 109
        %v810 = vpop.permute.xlu0 %809
        %811 = vrot.lane.b32.xlu0 %v800, 109
        %v812 = vpop.permute.xlu0 %811
        %813 = vrot.lane.b32.xlu0 %v801, 109
        %v814 = vpop.permute.xlu0 %813
        %815 = vrot.lane.b32.xlu0 %v802, 109
        %v816 = vpop.permute.xlu0 %815
        %817 = vrot.lane.b32.xlu0 %v803, 109
        %v818 = vpop.permute.xlu0 %817
        %819 = vrot.lane.b32.xlu0 %v804, 109
        %v820 = vpop.permute.xlu0 %819
        %821 = vrot.lane.b32.xlu0 %v805, 109
        %v822 = vpop.permute.xlu0 %821
        %823 = vrot.lane.b32.xlu0 %v806, 109
        %v824 = vpop.permute.xlu0 %823
        %vm825 = vcmask 891904
        %v826 = vsel %vm825, %v808, %v810
        %v827 = vsel %vm825, %v810, %v812
        %v828 = vsel %vm825, %v814, %v816
        %v829 = vsel %vm825, %v816, %v818
        %v830 = vsel %vm825, %v820, %v822
        %v831 = vsel %vm825, %v822, %v824
        %841 = vst [vmem:[#allocation2 + $0x120] sm:$0xff] %v826
        %842 = vst [vmem:[#allocation2 + $0x128] sm:$0xff] %v827
        %vm843 = vcmask 891904
        %844 = vst.msk [vmem:[#allocation2 + $0x130] sm:$0xff] %vm843, %v812
        %845 = vst [vmem:[#allocation2 + $0x138] sm:$0xff] %v828
        %846 = vst [vmem:[#allocation2 + $0x140] sm:$0xff] %v829
        %847 = vst.msk [vmem:[#allocation2 + $0x148] sm:$0xff] %vm843, %v818
        %848 = vst [vmem:[#allocation2 + $0x150] sm:$0xff] %v830
        %849 = vst [vmem:[#allocation2 + $0x158] sm:$0xff] %v831
        %850 = vst.msk [vmem:[#allocation2 + $0x160] sm:$0xff] %vm843, %v824
        %v851 = vld [vmem:[%s273] sm:$0xf]
        %v852 = vld [vmem:[%s273 + $0x4] sm:$0xf]
        %v853 = vld [vmem:[%s273 + $0x8] sm:$0xf]
        %v854 = vld [vmem:[%s273 + $0xc] sm:$0xf]
        %v855 = vld [vmem:[%s273 + $0x10] sm:$0xf]
        %v856 = vld [vmem:[%s273 + $0x14] sm:$0xf]
        %v863 = vunpack.c.l.b16 %v851
        %v864 = vunpack.c.l.b16 %v852
        %v865 = vunpack.c.l.b16 %v853
        %v866 = vunpack.c.l.b16 %v854
        %v867 = vunpack.c.l.b16 %v855
        %v868 = vunpack.c.l.b16 %v856
        %v869 = vpack.c.b16 %v864, %v863
        %v870 = vpack.c.b16 %v866, %v865
        %v871 = vpack.c.b16 %v868, %v867
        %872 = vrot.lane.b32.xlu0 %v869, 109
        %v873 = vpop.permute.xlu0 %872
        %874 = vrot.lane.b32.xlu0 %v870, 109
        %v875 = vpop.permute.xlu0 %874
        %876 = vrot.lane.b32.xlu0 %v871, 109
        %v877 = vpop.permute.xlu0 %876
        %vm881 = vcmask 1048424
        %882 = vst.msk [vmem:[#allocation2 + $0x130] sm:$0xff] %vm881, %v873
        %883 = vst.msk [vmem:[#allocation2 + $0x148] sm:$0xff] %vm881, %v875
        %884 = vst.msk [vmem:[#allocation2 + $0x160] sm:$0xff] %vm881, %v877
        %v885 = vld [vmem:[%s266] sm:$0xff]
        %v886 = vld [vmem:[%s266 + $0x8] sm:$0xf]
        %v887 = vld [vmem:[%s266 + $0xc] sm:$0xff]
        %v888 = vld [vmem:[%s266 + $0x14] sm:$0xf]
        %v889 = vld [vmem:[%s266 + $0x18] sm:$0xff]
        %v890 = vld [vmem:[%s266 + $0x20] sm:$0xf]
        %v891 = vld [vmem:[%s266 + $0x24] sm:$0xff]
        %v892 = vld [vmem:[%s266 + $0x2c] sm:$0xf]
        %v893 = vld [vmem:[%s266 + $0x30] sm:$0xff]
        %v894 = vld [vmem:[%s266 + $0x38] sm:$0xf]
        %v895 = vld [vmem:[%s266 + $0x3c] sm:$0xff]
        %v896 = vld [vmem:[%s266 + $0x44] sm:$0xf]
        %v909 = vunpack.c.l.b16 %v885
        %v910 = vunpack.c.h.b16 %v885
        %v911 = vunpack.c.l.b16 %v886
        %v912 = vunpack.c.l.b16 %v887
        %v913 = vunpack.c.h.b16 %v887
        %v914 = vunpack.c.l.b16 %v888
        %v915 = vunpack.c.l.b16 %v889
        %v916 = vunpack.c.h.b16 %v889
        %v917 = vunpack.c.l.b16 %v890
        %v918 = vunpack.c.l.b16 %v891
        %v919 = vunpack.c.h.b16 %v891
        %v920 = vunpack.c.l.b16 %v892
        %v921 = vunpack.c.l.b16 %v893
        %v922 = vunpack.c.h.b16 %v893
        %v923 = vunpack.c.l.b16 %v894
        %v924 = vunpack.c.l.b16 %v895
        %v925 = vunpack.c.h.b16 %v895
        %v926 = vunpack.c.l.b16 %v896
        %v927 = vpack.c.b16 %v912, %v909
        %v928 = vpack.c.b16 %v913, %v910
        %v929 = vpack.c.b16 %v914, %v911
        %v930 = vpack.c.b16 %v918, %v915
        %v931 = vpack.c.b16 %v919, %v916
        %v932 = vpack.c.b16 %v920, %v917
        %v933 = vpack.c.b16 %v924, %v921
        %v934 = vpack.c.b16 %v925, %v922
        %v935 = vpack.c.b16 %v926, %v923
        %936 = vrot.lane.b32.xlu0 %v927, 108
        %v937 = vpop.permute.xlu0 %936
        %938 = vrot.lane.b32.xlu0 %v928, 108
        %v939 = vpop.permute.xlu0 %938
        %940 = vrot.lane.b32.xlu0 %v929, 108
        %v941 = vpop.permute.xlu0 %940
        %942 = vrot.lane.b32.xlu0 %v930, 108
        %v943 = vpop.permute.xlu0 %942
        %944 = vrot.lane.b32.xlu0 %v931, 108
        %v945 = vpop.permute.xlu0 %944
        %946 = vrot.lane.b32.xlu0 %v932, 108
        %v947 = vpop.permute.xlu0 %946
        %948 = vrot.lane.b32.xlu0 %v933, 108
        %v949 = vpop.permute.xlu0 %948
        %950 = vrot.lane.b32.xlu0 %v934, 108
        %v951 = vpop.permute.xlu0 %950
        %952 = vrot.lane.b32.xlu0 %v935, 108
        %v953 = vpop.permute.xlu0 %952
        %vm954 = vcmask 883712
        %v955 = vsel %vm954, %v937, %v939
        %v956 = vsel %vm954, %v939, %v941
        %v957 = vsel %vm954, %v943, %v945
        %v958 = vsel %vm954, %v945, %v947
        %v959 = vsel %vm954, %v949, %v951
        %v960 = vsel %vm954, %v951, %v953
        %970 = vst [vmem:[#allocation2 + $0x168] sm:$0xff] %v955
        %971 = vst [vmem:[#allocation2 + $0x170] sm:$0xff] %v956
        %vm972 = vcmask 883712
        %973 = vst.msk [vmem:[#allocation2 + $0x178] sm:$0xff] %vm972, %v941
        %974 = vst [vmem:[#allocation2 + $0x180] sm:$0xff] %v957
        %975 = vst [vmem:[#allocation2 + $0x188] sm:$0xff] %v958
        %976 = vst.msk [vmem:[#allocation2 + $0x190] sm:$0xff] %vm972, %v947
        %977 = vst [vmem:[#allocation2 + $0x198] sm:$0xff] %v959
        %978 = vst [vmem:[#allocation2 + $0x1a0] sm:$0xff] %v960
        %979 = vst.msk [vmem:[#allocation2 + $0x1a8] sm:$0xff] %vm972, %v953
        %v980 = vld [vmem:[%s273] sm:$0xf]
        %v981 = vld [vmem:[%s273 + $0x4] sm:$0xf]
        %v982 = vld [vmem:[%s273 + $0x8] sm:$0xf]
        %v983 = vld [vmem:[%s273 + $0xc] sm:$0xf]
        %v984 = vld [vmem:[%s273 + $0x10] sm:$0xf]
        %v985 = vld [vmem:[%s273 + $0x14] sm:$0xf]
        %v992 = vunpack.c.l.b16 %v980
        %v993 = vunpack.c.l.b16 %v981
        %v994 = vunpack.c.l.b16 %v982
        %v995 = vunpack.c.l.b16 %v983
        %v996 = vunpack.c.l.b16 %v984
        %v997 = vunpack.c.l.b16 %v985
        %v998 = vpack.c.b16 %v993, %v992
        %v999 = vpack.c.b16 %v995, %v994
        %v1000 = vpack.c.b16 %v997, %v996
        %1001 = vrot.lane.b32.xlu0 %v998, 108
        %v1002 = vpop.permute.xlu0 %1001
        %1003 = vrot.lane.b32.xlu0 %v999, 108
        %v1004 = vpop.permute.xlu0 %1003
        %1005 = vrot.lane.b32.xlu0 %v1000, 108
        %v1006 = vpop.permute.xlu0 %1005
        %vm1010 = vcmask 1048416
        %1011 = vst.msk [vmem:[#allocation2 + $0x178] sm:$0xff] %vm1010, %v1002
        %1012 = vst.msk [vmem:[#allocation2 + $0x190] sm:$0xff] %vm1010, %v1004
        %1013 = vst.msk [vmem:[#allocation2 + $0x1a8] sm:$0xff] %vm1010, %v1006
        %v1014 = vld [vmem:[%s266] sm:$0xff]
        %v1015 = vld [vmem:[%s266 + $0x8] sm:$0xf]
        %v1016 = vld [vmem:[%s266 + $0xc] sm:$0xff]
        %v1017 = vld [vmem:[%s266 + $0x14] sm:$0xf]
        %v1018 = vld [vmem:[%s266 + $0x18] sm:$0xff]
        %v1019 = vld [vmem:[%s266 + $0x20] sm:$0xf]
        %v1020 = vld [vmem:[%s266 + $0x24] sm:$0xff]
        %v1021 = vld [vmem:[%s266 + $0x2c] sm:$0xf]
        %v1022 = vld [vmem:[%s266 + $0x30] sm:$0xff]
        %v1023 = vld [vmem:[%s266 + $0x38] sm:$0xf]
        %v1024 = vld [vmem:[%s266 + $0x3c] sm:$0xff]
        %v1025 = vld [vmem:[%s266 + $0x44] sm:$0xf]
        %v1038 = vunpack.c.l.b16 %v1014
        %v1039 = vunpack.c.h.b16 %v1014
        %v1040 = vunpack.c.l.b16 %v1015
        %v1041 = vunpack.c.l.b16 %v1016
        %v1042 = vunpack.c.h.b16 %v1016
        %v1043 = vunpack.c.l.b16 %v1017
        %v1044 = vunpack.c.l.b16 %v1018
        %v1045 = vunpack.c.h.b16 %v1018
        %v1046 = vunpack.c.l.b16 %v1019
        %v1047 = vunpack.c.l.b16 %v1020
        %v1048 = vunpack.c.h.b16 %v1020
        %v1049 = vunpack.c.l.b16 %v1021
        %v1050 = vunpack.c.l.b16 %v1022
        %v1051 = vunpack.c.h.b16 %v1022
        %v1052 = vunpack.c.l.b16 %v1023
        %v1053 = vunpack.c.l.b16 %v1024
        %v1054 = vunpack.c.h.b16 %v1024
        %v1055 = vunpack.c.l.b16 %v1025
        %v1056 = vpack.c.b16 %v1041, %v1038
        %v1057 = vpack.c.b16 %v1042, %v1039
        %v1058 = vpack.c.b16 %v1043, %v1040
        %v1059 = vpack.c.b16 %v1047, %v1044
        %v1060 = vpack.c.b16 %v1048, %v1045
        %v1061 = vpack.c.b16 %v1049, %v1046
        %v1062 = vpack.c.b16 %v1053, %v1050
        %v1063 = vpack.c.b16 %v1054, %v1051
        %v1064 = vpack.c.b16 %v1055, %v1052
        %1065 = vrot.lane.b32.xlu0 %v1056, 92
        %v1066 = vpop.permute.xlu0 %1065
        %1067 = vrot.lane.b32.xlu0 %v1057, 92
        %v1068 = vpop.permute.xlu0 %1067
        %1069 = vrot.lane.b32.xlu0 %v1058, 92
        %v1070 = vpop.permute.xlu0 %1069
        %1071 = vrot.lane.b32.xlu0 %v1059, 92
        %v1072 = vpop.permute.xlu0 %1071
        %1073 = vrot.lane.b32.xlu0 %v1060, 92
        %v1074 = vpop.permute.xlu0 %1073
        %1075 = vrot.lane.b32.xlu0 %v1061, 92
        %v1076 = vpop.permute.xlu0 %1075
        %1077 = vrot.lane.b32.xlu0 %v1062, 92
        %v1078 = vpop.permute.xlu0 %1077
        %1079 = vrot.lane.b32.xlu0 %v1063, 92
        %v1080 = vpop.permute.xlu0 %1079
        %1081 = vrot.lane.b32.xlu0 %v1064, 92
        %v1082 = vpop.permute.xlu0 %1081
        %vm1083 = vcmask 752640
        %v1084 = vsel %vm1083, %v1066, %v1068
        %v1085 = vsel %vm1083, %v1068, %v1070
        %v1086 = vsel %vm1083, %v1072, %v1074
        %v1087 = vsel %vm1083, %v1074, %v1076
        %v1088 = vsel %vm1083, %v1078, %v1080
        %v1089 = vsel %vm1083, %v1080, %v1082
        %1099 = vst [vmem:[#allocation2 + $0x1b0] sm:$0xff] %v1084
        %1100 = vst [vmem:[#allocation2 + $0x1b8] sm:$0xff] %v1085
        %vm1101 = vcmask 752640
        %1102 = vst.msk [vmem:[#allocation2 + $0x1c0] sm:$0xff] %vm1101, %v1070
        %1103 = vst [vmem:[#allocation2 + $0x1c8] sm:$0xff] %v1086
        %1104 = vst [vmem:[#allocation2 + $0x1d0] sm:$0xff] %v1087
        %1105 = vst.msk [vmem:[#allocation2 + $0x1d8] sm:$0xff] %vm1101, %v1076
        %1106 = vst [vmem:[#allocation2 + $0x1e0] sm:$0xff] %v1088
        %1107 = vst [vmem:[#allocation2 + $0x1e8] sm:$0xff] %v1089
        %1108 = vst.msk [vmem:[#allocation2 + $0x1f0] sm:$0xff] %vm1101, %v1082
        %v1109 = vld [vmem:[%s273] sm:$0xf]
        %v1110 = vld [vmem:[%s273 + $0x4] sm:$0xf]
        %v1111 = vld [vmem:[%s273 + $0x8] sm:$0xf]
        %v1112 = vld [vmem:[%s273 + $0xc] sm:$0xf]
        %v1113 = vld [vmem:[%s273 + $0x10] sm:$0xf]
        %v1114 = vld [vmem:[%s273 + $0x14] sm:$0xf]
        %v1121 = vunpack.c.l.b16 %v1109
        %v1122 = vunpack.c.l.b16 %v1110
        %v1123 = vunpack.c.l.b16 %v1111
        %v1124 = vunpack.c.l.b16 %v1112
        %v1125 = vunpack.c.l.b16 %v1113
        %v1126 = vunpack.c.l.b16 %v1114
        %v1127 = vpack.c.b16 %v1122, %v1121
        %v1128 = vpack.c.b16 %v1124, %v1123
        %v1129 = vpack.c.b16 %v1126, %v1125
        %1130 = vrot.lane.b32.xlu0 %v1127, 92
        %v1131 = vpop.permute.xlu0 %1130
        %1132 = vrot.lane.b32.xlu0 %v1128, 92
        %v1133 = vpop.permute.xlu0 %1132
        %1134 = vrot.lane.b32.xlu0 %v1129, 92
        %v1135 = vpop.permute.xlu0 %1134
        %vm1139 = vcmask 1048288
        %1140 = vst.msk [vmem:[#allocation2 + $0x1c0] sm:$0xff] %vm1139, %v1131
        %1141 = vst.msk [vmem:[#allocation2 + $0x1d8] sm:$0xff] %vm1139, %v1133
        %1142 = vst.msk [vmem:[#allocation2 + $0x1f0] sm:$0xff] %vm1139, %v1135
        %v1143 = vld [vmem:[%s266] sm:$0xff]
        %v1144 = vld [vmem:[%s266 + $0x8] sm:$0xf]
        %v1145 = vld [vmem:[%s266 + $0xc] sm:$0xff]
        %v1146 = vld [vmem:[%s266 + $0x14] sm:$0xf]
        %v1147 = vld [vmem:[%s266 + $0x18] sm:$0xff]
        %v1148 = vld [vmem:[%s266 + $0x20] sm:$0xf]
        %v1149 = vld [vmem:[%s266 + $0x24] sm:$0xff]
        %v1150 = vld [vmem:[%s266 + $0x2c] sm:$0xf]
        %v1151 = vld [vmem:[%s266 + $0x30] sm:$0xff]
        %v1152 = vld [vmem:[%s266 + $0x38] sm:$0xf]
        %v1153 = vld [vmem:[%s266 + $0x3c] sm:$0xff]
        %v1154 = vld [vmem:[%s266 + $0x44] sm:$0xf]
        %v1167 = vunpack.c.l.b16 %v1143
        %v1168 = vunpack.c.h.b16 %v1143
        %v1169 = vunpack.c.l.b16 %v1144
        %v1170 = vunpack.c.l.b16 %v1145
        %v1171 = vunpack.c.h.b16 %v1145
        %v1172 = vunpack.c.l.b16 %v1146
        %v1173 = vunpack.c.l.b16 %v1147
        %v1174 = vunpack.c.h.b16 %v1147
        %v1175 = vunpack.c.l.b16 %v1148
        %v1176 = vunpack.c.l.b16 %v1149
        %v1177 = vunpack.c.h.b16 %v1149
        %v1178 = vunpack.c.l.b16 %v1150
        %v1179 = vunpack.c.l.b16 %v1151
        %v1180 = vunpack.c.h.b16 %v1151
        %v1181 = vunpack.c.l.b16 %v1152
        %v1182 = vunpack.c.l.b16 %v1153
        %v1183 = vunpack.c.h.b16 %v1153
        %v1184 = vunpack.c.l.b16 %v1154
        %v1185 = vpack.c.b16 %v1170, %v1167
        %v1186 = vpack.c.b16 %v1171, %v1168
        %v1187 = vpack.c.b16 %v1172, %v1169
        %v1188 = vpack.c.b16 %v1176, %v1173
        %v1189 = vpack.c.b16 %v1177, %v1174
        %v1190 = vpack.c.b16 %v1178, %v1175
        %v1191 = vpack.c.b16 %v1182, %v1179
        %v1192 = vpack.c.b16 %v1183, %v1180
        %v1193 = vpack.c.b16 %v1184, %v1181
        %1194 = vrot.lane.b32.xlu0 %v1185, 91
        %v1195 = vpop.permute.xlu0 %1194
        %1196 = vrot.lane.b32.xlu0 %v1186, 91
        %v1197 = vpop.permute.xlu0 %1196
        %1198 = vrot.lane.b32.xlu0 %v1187, 91
        %v1199 = vpop.permute.xlu0 %1198
        %1200 = vrot.lane.b32.xlu0 %v1188, 91
        %v1201 = vpop.permute.xlu0 %1200
        %1202 = vrot.lane.b32.xlu0 %v1189, 91
        %v1203 = vpop.permute.xlu0 %1202
        %1204 = vrot.lane.b32.xlu0 %v1190, 91
        %v1205 = vpop.permute.xlu0 %1204
        %1206 = vrot.lane.b32.xlu0 %v1191, 91
        %v1207 = vpop.permute.xlu0 %1206
        %1208 = vrot.lane.b32.xlu0 %v1192, 91
        %v1209 = vpop.permute.xlu0 %1208
        %1210 = vrot.lane.b32.xlu0 %v1193, 91
        %v1211 = vpop.permute.xlu0 %1210
        %vm1212 = vcmask 744448
        %v1213 = vsel %vm1212, %v1195, %v1197
        %v1214 = vsel %vm1212, %v1197, %v1199
        %v1215 = vsel %vm1212, %v1201, %v1203
        %v1216 = vsel %vm1212, %v1203, %v1205
        %v1217 = vsel %vm1212, %v1207, %v1209
        %v1218 = vsel %vm1212, %v1209, %v1211
        %1228 = vst [vmem:[#allocation2 + $0x1f8] sm:$0xff] %v1213
        %1229 = vst [vmem:[#allocation2 + $0x200] sm:$0xff] %v1214
        %vm1230 = vcmask 744448
        %1231 = vst.msk [vmem:[#allocation2 + $0x208] sm:$0xff] %vm1230, %v1199
        %1232 = vst [vmem:[#allocation2 + $0x210] sm:$0xff] %v1215
        %1233 = vst [vmem:[#allocation2 + $0x218] sm:$0xff] %v1216
        %1234 = vst.msk [vmem:[#allocation2 + $0x220] sm:$0xff] %vm1230, %v1205
        %1235 = vst [vmem:[#allocation2 + $0x228] sm:$0xff] %v1217
        %1236 = vst [vmem:[#allocation2 + $0x230] sm:$0xff] %v1218
        %1237 = vst.msk [vmem:[#allocation2 + $0x238] sm:$0xff] %vm1230, %v1211
        %v1238 = vld [vmem:[%s273] sm:$0xf]
        %v1239 = vld [vmem:[%s273 + $0x4] sm:$0xf]
        %v1240 = vld [vmem:[%s273 + $0x8] sm:$0xf]
        %v1241 = vld [vmem:[%s273 + $0xc] sm:$0xf]
        %v1242 = vld [vmem:[%s273 + $0x10] sm:$0xf]
        %v1243 = vld [vmem:[%s273 + $0x14] sm:$0xf]
        %v1250 = vunpack.c.l.b16 %v1238
        %v1251 = vunpack.c.l.b16 %v1239
        %v1252 = vunpack.c.l.b16 %v1240
        %v1253 = vunpack.c.l.b16 %v1241
        %v1254 = vunpack.c.l.b16 %v1242
        %v1255 = vunpack.c.l.b16 %v1243
        %v1256 = vpack.c.b16 %v1251, %v1250
        %v1257 = vpack.c.b16 %v1253, %v1252
        %v1258 = vpack.c.b16 %v1255, %v1254
        %1259 = vrot.lane.b32.xlu0 %v1256, 91
        %v1260 = vpop.permute.xlu0 %1259
        %1261 = vrot.lane.b32.xlu0 %v1257, 91
        %v1262 = vpop.permute.xlu0 %1261
        %1263 = vrot.lane.b32.xlu0 %v1258, 91
        %v1264 = vpop.permute.xlu0 %1263
        %vm1268 = vcmask 1048280
        %1269 = vst.msk [vmem:[#allocation2 + $0x208] sm:$0xff] %vm1268, %v1260
        %1270 = vst.msk [vmem:[#allocation2 + $0x220] sm:$0xff] %vm1268, %v1262
        %1271 = vst.msk [vmem:[#allocation2 + $0x238] sm:$0xff] %vm1268, %v1264
        %v1272 = vld [vmem:[%s266] sm:$0xff]
        %v1273 = vld [vmem:[%s266 + $0x8] sm:$0xf]
        %v1274 = vld [vmem:[%s266 + $0xc] sm:$0xff]
        %v1275 = vld [vmem:[%s266 + $0x14] sm:$0xf]
        %v1276 = vld [vmem:[%s266 + $0x18] sm:$0xff]
        %v1277 = vld [vmem:[%s266 + $0x20] sm:$0xf]
        %v1278 = vld [vmem:[%s266 + $0x24] sm:$0xff]
        %v1279 = vld [vmem:[%s266 + $0x2c] sm:$0xf]
        %v1280 = vld [vmem:[%s266 + $0x30] sm:$0xff]
        %v1281 = vld [vmem:[%s266 + $0x38] sm:$0xf]
        %v1282 = vld [vmem:[%s266 + $0x3c] sm:$0xff]
        %v1283 = vld [vmem:[%s266 + $0x44] sm:$0xf]
        %v1296 = vunpack.c.l.b16 %v1272
        %v1297 = vunpack.c.h.b16 %v1272
        %v1298 = vunpack.c.l.b16 %v1273
        %v1299 = vunpack.c.l.b16 %v1274
        %v1300 = vunpack.c.h.b16 %v1274
        %v1301 = vunpack.c.l.b16 %v1275
        %v1302 = vunpack.c.l.b16 %v1276
        %v1303 = vunpack.c.h.b16 %v1276
        %v1304 = vunpack.c.l.b16 %v1277
        %v1305 = vunpack.c.l.b16 %v1278
        %v1306 = vunpack.c.h.b16 %v1278
        %v1307 = vunpack.c.l.b16 %v1279
        %v1308 = vunpack.c.l.b16 %v1280
        %v1309 = vunpack.c.h.b16 %v1280
        %v1310 = vunpack.c.l.b16 %v1281
        %v1311 = vunpack.c.l.b16 %v1282
        %v1312 = vunpack.c.h.b16 %v1282
        %v1313 = vunpack.c.l.b16 %v1283
        %v1314 = vpack.c.b16 %v1299, %v1296
        %v1315 = vpack.c.b16 %v1300, %v1297
        %v1316 = vpack.c.b16 %v1301, %v1298
        %v1317 = vpack.c.b16 %v1305, %v1302
        %v1318 = vpack.c.b16 %v1306, %v1303
        %v1319 = vpack.c.b16 %v1307, %v1304
        %v1320 = vpack.c.b16 %v1311, %v1308
        %v1321 = vpack.c.b16 %v1312, %v1309
        %v1322 = vpack.c.b16 %v1313, %v1310
        %1323 = vrot.lane.b32.xlu0 %v1314, 90
        %v1324 = vpop.permute.xlu0 %1323
        %1325 = vrot.lane.b32.xlu0 %v1315, 90
        %v1326 = vpop.permute.xlu0 %1325
        %1327 = vrot.lane.b32.xlu0 %v1316, 90
        %v1328 = vpop.permute.xlu0 %1327
        %1329 = vrot.lane.b32.xlu0 %v1317, 90
        %v1330 = vpop.permute.xlu0 %1329
        %1331 = vrot.lane.b32.xlu0 %v1318, 90
        %v1332 = vpop.permute.xlu0 %1331
        %1333 = vrot.lane.b32.xlu0 %v1319, 90
        %v1334 = vpop.permute.xlu0 %1333
        %1335 = vrot.lane.b32.xlu0 %v1320, 90
        %v1336 = vpop.permute.xlu0 %1335
        %1337 = vrot.lane.b32.xlu0 %v1321, 90
        %v1338 = vpop.permute.xlu0 %1337
        %1339 = vrot.lane.b32.xlu0 %v1322, 90
        %v1340 = vpop.permute.xlu0 %1339
        %vm1341 = vcmask 736256
        %v1342 = vsel %vm1341, %v1324, %v1326
        %v1343 = vsel %vm1341, %v1326, %v1328
        %v1344 = vsel %vm1341, %v1330, %v1332
        %v1345 = vsel %vm1341, %v1332, %v1334
        %v1346 = vsel %vm1341, %v1336, %v1338
        %v1347 = vsel %vm1341, %v1338, %v1340
        %1357 = vst [vmem:[#allocation2 + $0x240] sm:$0xff] %v1342
        %1358 = vst [vmem:[#allocation2 + $0x248] sm:$0xff] %v1343
        %vm1359 = vcmask 736256
        %1360 = vst.msk [vmem:[#allocation2 + $0x250] sm:$0xff] %vm1359, %v1328
        %1361 = vst [vmem:[#allocation2 + $0x258] sm:$0xff] %v1344
        %1362 = vst [vmem:[#allocation2 + $0x260] sm:$0xff] %v1345
        %1363 = vst.msk [vmem:[#allocation2 + $0x268] sm:$0xff] %vm1359, %v1334
        %1364 = vst [vmem:[#allocation2 + $0x270] sm:$0xff] %v1346
        %1365 = vst [vmem:[#allocation2 + $0x278] sm:$0xff] %v1347
        %1366 = vst.msk [vmem:[#allocation2 + $0x280] sm:$0xff] %vm1359, %v1340
        %v1367 = vld [vmem:[%s273] sm:$0xf]
        %v1368 = vld [vmem:[%s273 + $0x4] sm:$0xf]
        %v1369 = vld [vmem:[%s273 + $0x8] sm:$0xf]
        %v1370 = vld [vmem:[%s273 + $0xc] sm:$0xf]
        %v1371 = vld [vmem:[%s273 + $0x10] sm:$0xf]
        %v1372 = vld [vmem:[%s273 + $0x14] sm:$0xf]
        %v1379 = vunpack.c.l.b16 %v1367
        %v1380 = vunpack.c.l.b16 %v1368
        %v1381 = vunpack.c.l.b16 %v1369
        %v1382 = vunpack.c.l.b16 %v1370
        %v1383 = vunpack.c.l.b16 %v1371
        %v1384 = vunpack.c.l.b16 %v1372
        %v1385 = vpack.c.b16 %v1380, %v1379
        %v1386 = vpack.c.b16 %v1382, %v1381
        %v1387 = vpack.c.b16 %v1384, %v1383
        %1388 = vrot.lane.b32.xlu0 %v1385, 90
        %v1389 = vpop.permute.xlu0 %1388
        %1390 = vrot.lane.b32.xlu0 %v1386, 90
        %v1391 = vpop.permute.xlu0 %1390
        %1392 = vrot.lane.b32.xlu0 %v1387, 90
        %v1393 = vpop.permute.xlu0 %1392
        %vm1397 = vcmask 1048272
        %1398 = vst.msk [vmem:[#allocation2 + $0x250] sm:$0xff] %vm1397, %v1389
        %1399 = vst.msk [vmem:[#allocation2 + $0x268] sm:$0xff] %vm1397, %v1391
        %1400 = vst.msk [vmem:[#allocation2 + $0x280] sm:$0xff] %vm1397, %v1393
        %v1401 = vld [vmem:[%s2] sm:$0xff]
        %v1402 = vld [vmem:[%s2 + $0x8] sm:$0xff]
        %v1403 = vld [vmem:[%s2 + $0x10] sm:$0xff]
        %v1404 = vld [vmem:[%s2 + $0x18] sm:$0xff]
        %v1405 = vld [vmem:[%s2 + $0x20] sm:$0xff]
        %v1406 = vld [vmem:[%s2 + $0x28] sm:$0xff]
        %v1407 = vld [vmem:[%s2 + $0x30] sm:$0xff]
        %v1408 = vld [vmem:[%s2 + $0x38] sm:$0xff]
        %v1409 = vld [vmem:[%s2 + $0x40] sm:$0xff]
        %v1410 = vld [vmem:[%s2 + $0x48] sm:$0xff]
        %v1411 = vld [vmem:[%s2 + $0x50] sm:$0xff]
        %v1412 = vld [vmem:[%s2 + $0x58] sm:$0xff]
        %v1413 = vld [vmem:[%s2 + $0x60] sm:$0xff]
        %v1414 = vld [vmem:[%s2 + $0x68] sm:$0xff]
        %v1415 = vld [vmem:[%s2 + $0x70] sm:$0xff]
        %v1416 = vld [vmem:[%s2 + $0x78] sm:$0xff]
        %v1417 = vld [vmem:[%s2 + $0x80] sm:$0xff]
        %v1418 = vld [vmem:[%s2 + $0x88] sm:$0xff]
        %v1419 = vld [vmem:[%s2 + $0x90] sm:$0xff]
        %v1420 = vld [vmem:[%s2 + $0x98] sm:$0xff]
        %v1421 = vld [vmem:[%s2 + $0xa0] sm:$0xff]
        %v1422 = vld [vmem:[%s2 + $0xa8] sm:$0xff]
        %v1423 = vld [vmem:[%s2 + $0xb0] sm:$0xff]
        %v1424 = vld [vmem:[%s2 + $0xb8] sm:$0xff]
        %v1425 = vld [vmem:[%s2 + $0xc0] sm:$0xff]
        %v1426 = vld [vmem:[%s2 + $0xc8] sm:$0xff]
        %v1427 = vld [vmem:[%s2 + $0xd0] sm:$0xff]
        %v1428 = vld [vmem:[%s2 + $0xd8] sm:$0xff]
        %v1429 = vld [vmem:[%s2 + $0xe0] sm:$0xff]
        %v1430 = vld [vmem:[%s2 + $0xe8] sm:$0xff]
        %v1431 = vld [vmem:[%s2 + $0xf0] sm:$0xff]
        %v1432 = vld [vmem:[%s2 + $0xf8] sm:$0xff]
        %v1433 = vld [vmem:[#allocation2] sm:$0xff]
        %v1434 = vld [vmem:[#allocation2 + $0x8] sm:$0xff]
        %v1435 = vld [vmem:[#allocation2 + $0x10] sm:$0xff]
        %v1436 = vld [vmem:[#allocation2 + $0x18] sm:$0xff]
        %v1437 = vld [vmem:[#allocation2 + $0x20] sm:$0xff]
        %v1438 = vld [vmem:[#allocation2 + $0x28] sm:$0xff]
        %v1439 = vld [vmem:[#allocation2 + $0x30] sm:$0xff]
        %v1440 = vld [vmem:[#allocation2 + $0x38] sm:$0xff]
        %v1441 = vld [vmem:[#allocation2 + $0x40] sm:$0xff]
        %v1442 = vld [vmem:[#allocation2 + $0x48] sm:$0xff]
        %v1443 = vld [vmem:[#allocation2 + $0x50] sm:$0xff]
        %v1444 = vld [vmem:[#allocation2 + $0x58] sm:$0xff]
        %v1445 = vld [vmem:[#allocation2 + $0x60] sm:$0xff]
        %v1446 = vld [vmem:[#allocation2 + $0x68] sm:$0xff]
        %v1447 = vld [vmem:[#allocation2 + $0x70] sm:$0xff]
        %v1448 = vld [vmem:[#allocation2 + $0x78] sm:$0xff]
        %v1449 = vld [vmem:[#allocation2 + $0x80] sm:$0xff]
        %v1450 = vld [vmem:[#allocation2 + $0x88] sm:$0xff]
        %v1451 = vld [vmem:[#allocation2 + $0x90] sm:$0xff]
        %v1452 = vld [vmem:[#allocation2 + $0x98] sm:$0xff]
        %v1453 = vld [vmem:[#allocation2 + $0xa0] sm:$0xff]
        %v1454 = vld [vmem:[#allocation2 + $0xa8] sm:$0xff]
        %v1455 = vld [vmem:[#allocation2 + $0xb0] sm:$0xff]
        %v1456 = vld [vmem:[#allocation2 + $0xb8] sm:$0xff]
        %v1457 = vld [vmem:[#allocation2 + $0xc0] sm:$0xff]
        %v1458 = vld [vmem:[#allocation2 + $0xc8] sm:$0xff]
        %v1459 = vld [vmem:[#allocation2 + $0xd0] sm:$0xff]
        %v1460 = vld [vmem:[#allocation2 + $0xd8] sm:$0xff]
        %v1461 = vld [vmem:[#allocation2 + $0xe0] sm:$0xff]
        %v1462 = vld [vmem:[#allocation2 + $0xe8] sm:$0xff]
        %v1463 = vld [vmem:[#allocation2 + $0xf0] sm:$0xff]
        %v1464 = vld [vmem:[#allocation2 + $0xf8] sm:$0xff]
        %v1465 = vld [vmem:[#allocation2 + $0x100] sm:$0xff]
        %v1466 = vld [vmem:[#allocation2 + $0x108] sm:$0xff]
        %v1467 = vld [vmem:[#allocation2 + $0x110] sm:$0xff]
        %v1468 = vld [vmem:[#allocation2 + $0x118] sm:$0xff]
        %v1469 = vld [vmem:[#allocation2 + $0x120] sm:$0xff]
        %v1470 = vld [vmem:[#allocation2 + $0x128] sm:$0xff]
        %v1471 = vld [vmem:[#allocation2 + $0x130] sm:$0xff]
        %v1472 = vld [vmem:[#allocation2 + $0x138] sm:$0xff]
        %v1473 = vld [vmem:[#allocation2 + $0x140] sm:$0xff]
        %v1474 = vld [vmem:[#allocation2 + $0x148] sm:$0xff]
        %v1475 = vld [vmem:[#allocation2 + $0x150] sm:$0xff]
        %v1476 = vld [vmem:[#allocation2 + $0x158] sm:$0xff]
        %v1477 = vld [vmem:[#allocation2 + $0x160] sm:$0xff]
        %v1478 = vld [vmem:[#allocation2 + $0x168] sm:$0xff]
        %v1479 = vld [vmem:[#allocation2 + $0x170] sm:$0xff]
        %v1480 = vld [vmem:[#allocation2 + $0x178] sm:$0xff]
        %v1481 = vld [vmem:[#allocation2 + $0x180] sm:$0xff]
        %v1482 = vld [vmem:[#allocation2 + $0x188] sm:$0xff]
        %v1483 = vld [vmem:[#allocation2 + $0x190] sm:$0xff]
        %v1484 = vld [vmem:[#allocation2 + $0x198] sm:$0xff]
        %v1485 = vld [vmem:[#allocation2 + $0x1a0] sm:$0xff]
        %v1486 = vld [vmem:[#allocation2 + $0x1a8] sm:$0xff]
        %v1487 = vld [vmem:[#allocation2 + $0x1b0] sm:$0xff]
        %v1488 = vld [vmem:[#allocation2 + $0x1b8] sm:$0xff]
        %v1489 = vld [vmem:[#allocation2 + $0x1c0] sm:$0xff]
        %v1490 = vld [vmem:[#allocation2 + $0x1c8] sm:$0xff]
        %v1491 = vld [vmem:[#allocation2 + $0x1d0] sm:$0xff]
        %v1492 = vld [vmem:[#allocation2 + $0x1d8] sm:$0xff]
        %v1493 = vld [vmem:[#allocation2 + $0x1e0] sm:$0xff]
        %v1494 = vld [vmem:[#allocation2 + $0x1e8] sm:$0xff]
        %v1495 = vld [vmem:[#allocation2 + $0x1f0] sm:$0xff]
        %v1496 = vld [vmem:[#allocation2 + $0x1f8] sm:$0xff]
        %v1497 = vld [vmem:[#allocation2 + $0x200] sm:$0xff]
        %v1498 = vld [vmem:[#allocation2 + $0x208] sm:$0xff]
        %v1499 = vld [vmem:[#allocation2 + $0x210] sm:$0xff]
        %v1500 = vld [vmem:[#allocation2 + $0x218] sm:$0xff]
        %v1501 = vld [vmem:[#allocation2 + $0x220] sm:$0xff]
        %v1502 = vld [vmem:[#allocation2 + $0x228] sm:$0xff]
        %v1503 = vld [vmem:[#allocation2 + $0x230] sm:$0xff]
        %v1504 = vld [vmem:[#allocation2 + $0x238] sm:$0xff]
        %v1505 = vld [vmem:[#allocation2 + $0x240] sm:$0xff]
        %v1506 = vld [vmem:[#allocation2 + $0x248] sm:$0xff]
        %v1507 = vld [vmem:[#allocation2 + $0x250] sm:$0xff]
        %v1508 = vld [vmem:[#allocation2 + $0x258] sm:$0xff]
        %v1509 = vld [vmem:[#allocation2 + $0x260] sm:$0xff]
        %v1510 = vld [vmem:[#allocation2 + $0x268] sm:$0xff]
        %v1511 = vld [vmem:[#allocation2 + $0x270] sm:$0xff]
        %v1512 = vld [vmem:[#allocation2 + $0x278] sm:$0xff]
        %v1513 = vld [vmem:[#allocation2 + $0x280] sm:$0xff]
        %v1546 = vunpack.c.l.b16 %v1401
        %v1547 = vunpack.c.h.b16 %v1401
        %v1548 = vunpack.c.l.b16 %v1402
        %v1549 = vunpack.c.h.b16 %v1402
        %v1550 = vunpack.c.l.b16 %v1403
        %v1551 = vunpack.c.h.b16 %v1403
        %v1552 = vunpack.c.l.b16 %v1404
        %v1553 = vunpack.c.h.b16 %v1404
        %v1554 = vunpack.c.l.b16 %v1405
        %v1555 = vunpack.c.h.b16 %v1405
        %v1556 = vunpack.c.l.b16 %v1406
        %v1557 = vunpack.c.h.b16 %v1406
        %v1558 = vunpack.c.l.b16 %v1407
        %v1559 = vunpack.c.h.b16 %v1407
        %v1560 = vunpack.c.l.b16 %v1408
        %v1561 = vunpack.c.h.b16 %v1408
        %v1562 = vunpack.c.l.b16 %v1409
        %v1563 = vunpack.c.h.b16 %v1409
        %v1564 = vunpack.c.l.b16 %v1410
        %v1565 = vunpack.c.h.b16 %v1410
        %v1566 = vunpack.c.l.b16 %v1411
        %v1567 = vunpack.c.h.b16 %v1411
        %v1568 = vunpack.c.l.b16 %v1412
        %v1569 = vunpack.c.h.b16 %v1412
        %v1570 = vunpack.c.l.b16 %v1413
        %v1571 = vunpack.c.h.b16 %v1413
        %v1572 = vunpack.c.l.b16 %v1414
        %v1573 = vunpack.c.h.b16 %v1414
        %v1574 = vunpack.c.l.b16 %v1415
        %v1575 = vunpack.c.h.b16 %v1415
        %v1576 = vunpack.c.l.b16 %v1416
        %v1577 = vunpack.c.h.b16 %v1416
        %v1578 = vunpack.c.l.b16 %v1417
        %v1579 = vunpack.c.h.b16 %v1417
        %v1580 = vunpack.c.l.b16 %v1418
        %v1581 = vunpack.c.h.b16 %v1418
        %v1582 = vunpack.c.l.b16 %v1419
        %v1583 = vunpack.c.h.b16 %v1419
        %v1584 = vunpack.c.l.b16 %v1420
        %v1585 = vunpack.c.h.b16 %v1420
        %v1586 = vunpack.c.l.b16 %v1421
        %v1587 = vunpack.c.h.b16 %v1421
        %v1588 = vunpack.c.l.b16 %v1422
        %v1589 = vunpack.c.h.b16 %v1422
        %v1590 = vunpack.c.l.b16 %v1423
        %v1591 = vunpack.c.h.b16 %v1423
        %v1592 = vunpack.c.l.b16 %v1424
        %v1593 = vunpack.c.h.b16 %v1424
        %v1594 = vunpack.c.l.b16 %v1425
        %v1595 = vunpack.c.h.b16 %v1425
        %v1596 = vunpack.c.l.b16 %v1426
        %v1597 = vunpack.c.h.b16 %v1426
        %v1598 = vunpack.c.l.b16 %v1427
        %v1599 = vunpack.c.h.b16 %v1427
        %v1600 = vunpack.c.l.b16 %v1428
        %v1601 = vunpack.c.h.b16 %v1428
        %v1602 = vunpack.c.l.b16 %v1429
        %v1603 = vunpack.c.h.b16 %v1429
        %v1604 = vunpack.c.l.b16 %v1430
        %v1605 = vunpack.c.h.b16 %v1430
        %v1606 = vunpack.c.l.b16 %v1431
        %v1607 = vunpack.c.h.b16 %v1431
        %v1608 = vunpack.c.l.b16 %v1432
        %v1609 = vunpack.c.h.b16 %v1432
        %v1610 = vpack.c.b16 %v1550, %v1546
        %v1611 = vpack.c.b16 %v1551, %v1547
        %v1612 = vpack.c.b16 %v1552, %v1548
        %v1613 = vpack.c.b16 %v1553, %v1549
        %v1614 = vpack.c.b16 %v1558, %v1554
        %v1615 = vpack.c.b16 %v1559, %v1555
        %v1616 = vpack.c.b16 %v1560, %v1556
        %v1617 = vpack.c.b16 %v1561, %v1557
        %v1618 = vpack.c.b16 %v1566, %v1562
        %v1619 = vpack.c.b16 %v1567, %v1563
        %v1620 = vpack.c.b16 %v1568, %v1564
        %v1621 = vpack.c.b16 %v1569, %v1565
        %v1622 = vpack.c.b16 %v1574, %v1570
        %v1623 = vpack.c.b16 %v1575, %v1571
        %v1624 = vpack.c.b16 %v1576, %v1572
        %v1625 = vpack.c.b16 %v1577, %v1573
        %v1626 = vpack.c.b16 %v1582, %v1578
        %v1627 = vpack.c.b16 %v1583, %v1579
        %v1628 = vpack.c.b16 %v1584, %v1580
        %v1629 = vpack.c.b16 %v1585, %v1581
        %v1630 = vpack.c.b16 %v1590, %v1586
        %v1631 = vpack.c.b16 %v1591, %v1587
        %v1632 = vpack.c.b16 %v1592, %v1588
        %v1633 = vpack.c.b16 %v1593, %v1589
        %v1634 = vpack.c.b16 %v1598, %v1594
        %v1635 = vpack.c.b16 %v1599, %v1595
        %v1636 = vpack.c.b16 %v1600, %v1596
        %v1637 = vpack.c.b16 %v1601, %v1597
        %v1638 = vpack.c.b16 %v1606, %v1602
        %v1639 = vpack.c.b16 %v1607, %v1603
        %v1640 = vpack.c.b16 %v1608, %v1604
        %v1641 = vpack.c.b16 %v1609, %v1605
        %vm1666 = vcmask 392192
        %v1668 = vsel %vm1666, %v1613, 0
        %v1671 = vsel %vm1666, %v1617, 0
        %v1674 = vsel %vm1666, %v1621, 0
        %v1677 = vsel %vm1666, %v1625, 0
        %v1680 = vsel %vm1666, %v1629, 0
        %v1683 = vsel %vm1666, %v1633, 0
        %v1686 = vsel %vm1666, %v1637, 0
        %v1689 = vsel %vm1666, %v1641, 0
        %1691 = vmatprep.subr.bf16.mxu0 %v1434
        %1692 = vmatpush1.bf16.msra.mxu0 %v1433
        %1693 = vmatprep.subr.bf16.mxu0 %v1437
        %1694 = vmatpush1.bf16.msra.mxu0 %v1436
        %1695 = vmatprep.subr.bf16.mxu0 %v1440
        %1696 = vmatpush1.bf16.msra.mxu0 %v1439
        %1697 = vmatprep.subr.bf16.mxu0 %v1443
        %1698 = vmatpush1.bf16.msra.mxu0 %v1442
        %1699 = vmatprep.subr.bf16.mxu0 %v1446
        %1700 = vmatpush1.bf16.msra.mxu0 %v1445
        %1701 = vmatprep.subr.bf16.mxu0 %v1449
        %1702 = vmatpush1.bf16.msra.mxu0 %v1448
        %1703 = vmatprep.subr.bf16.mxu0 %v1452
        %1704 = vmatpush1.bf16.msra.mxu0 %v1451
        %1705 = vmatprep.subr.bf16.mxu0 %v1455
        %1706 = vmatpush1.bf16.msra.mxu0 %v1454
        %1707 = vmatprep.subr.bf16.mxu0 %v1458
        %1708 = vmatpush1.bf16.msra.mxu0 %v1457
        %1709 = vmatprep.subr.bf16.mxu0 %v1461
        %1710 = vmatpush1.bf16.msra.mxu0 %v1460
        %1711 = vmatprep.subr.bf16.mxu0 %v1464
        %1712 = vmatpush1.bf16.msra.mxu0 %v1463
        %1713 = vmatprep.subr.bf16.mxu0 %v1467
        %1714 = vmatpush1.bf16.msra.mxu0 %v1466
        %1715 = vmatprep.subr.bf16.mxu0 %v1470
        %1716 = vmatpush1.bf16.msra.mxu0 %v1469
        %1717 = vmatprep.subr.bf16.mxu0 %v1473
        %1718 = vmatpush1.bf16.msra.mxu0 %v1472
        %1719 = vmatprep.subr.bf16.mxu0 %v1476
        %1720 = vmatpush1.bf16.msra.mxu0 %v1475
        %1721 = vmatprep.subr.bf16.mxu0 %v1479
        %1722 = vmatpush1.bf16.msra.mxu0 %v1478
        %1723 = vmatprep.mubr.bf16.mxu0 %v1611
        %1724 = vmatmul.mubr.bf16.gmra.mrb[0].mxu0 %v1610
        %v1725 = vpop.f32.mrb[0].mxu0
        %v1726 = vadd.f32 0.0, %v1725
        %v1727 = vpop.f32.mrb[0].mxu0
        %v1728 = vadd.f32 0.0, %v1727
        %v1729 = vpop.f32.mrb[0].mxu0
        %v1730 = vadd.f32 0.0, %v1729
        %v1731 = vpop.f32.mrb[0].mxu0
        %v1732 = vadd.f32 0.0, %v1731
        %1733 = vmatprep.mubr.bf16.mxu0 %v1615
        %1734 = vmatmul.mubr.bf16.gmra.mrb[0].mxu0 %v1614
        %v1735 = vpop.f32.mrb[0].mxu0
        %v1736 = vadd.f32 0.0, %v1735
        %v1737 = vpop.f32.mrb[0].mxu0
        %v1738 = vadd.f32 0.0, %v1737
        %v1739 = vpop.f32.mrb[0].mxu0
        %v1740 = vadd.f32 0.0, %v1739
        %v1741 = vpop.f32.mrb[0].mxu0
        %v1742 = vadd.f32 0.0, %v1741
        %1743 = vmatprep.mubr.bf16.mxu0 %v1619
        %1744 = vmatmul.mubr.bf16.gmra.mrb[0].mxu0 %v1618
        %v1745 = vpop.f32.mrb[0].mxu0
        %v1746 = vadd.f32 0.0, %v1745
        %v1747 = vpop.f32.mrb[0].mxu0
        %v1748 = vadd.f32 0.0, %v1747
        %v1749 = vpop.f32.mrb[0].mxu0
        %v1750 = vadd.f32 0.0, %v1749
        %v1751 = vpop.f32.mrb[0].mxu0
        %v1752 = vadd.f32 0.0, %v1751
        %1753 = vmatprep.mubr.bf16.mxu0 %v1623
        %1754 = vmatmul.mubr.bf16.gmra.mrb[0].mxu0 %v1622
        %v1755 = vpop.f32.mrb[0].mxu0
        %v1756 = vadd.f32 0.0, %v1755
        %v1757 = vpop.f32.mrb[0].mxu0
        %v1758 = vadd.f32 0.0, %v1757
        %v1759 = vpop.f32.mrb[0].mxu0
        %v1760 = vadd.f32 0.0, %v1759
        %v1761 = vpop.f32.mrb[0].mxu0
        %v1762 = vadd.f32 0.0, %v1761
        %1763 = vmatprep.mubr.bf16.mxu0 %v1627
        %1764 = vmatmul.mubr.bf16.gmra.mrb[0].mxu0 %v1626
        %v1765 = vpop.f32.mrb[0].mxu0
        %v1766 = vadd.f32 0.0, %v1765
        %v1767 = vpop.f32.mrb[0].mxu0
        %v1768 = vadd.f32 0.0, %v1767
        %v1769 = vpop.f32.mrb[0].mxu0
        %v1770 = vadd.f32 0.0, %v1769
        %v1771 = vpop.f32.mrb[0].mxu0
        %v1772 = vadd.f32 0.0, %v1771
        %1773 = vmatprep.mubr.bf16.mxu0 %v1631
        %1774 = vmatmul.mubr.bf16.gmra.mrb[0].mxu0 %v1630
        %v1775 = vpop.f32.mrb[0].mxu0
        %v1776 = vadd.f32 0.0, %v1775
        %v1777 = vpop.f32.mrb[0].mxu0
        %v1778 = vadd.f32 0.0, %v1777
        %v1779 = vpop.f32.mrb[0].mxu0
        %v1780 = vadd.f32 0.0, %v1779
        %v1781 = vpop.f32.mrb[0].mxu0
        %v1782 = vadd.f32 0.0, %v1781
        %1783 = vmatprep.mubr.bf16.mxu0 %v1635
        %1784 = vmatmul.mubr.bf16.gmra.mrb[0].mxu0 %v1634
        %v1785 = vpop.f32.mrb[0].mxu0
        %v1786 = vadd.f32 0.0, %v1785
        %v1787 = vpop.f32.mrb[0].mxu0
        %v1788 = vadd.f32 0.0, %v1787
        %v1789 = vpop.f32.mrb[0].mxu0
        %v1790 = vadd.f32 0.0, %v1789
        %v1791 = vpop.f32.mrb[0].mxu0
        %v1792 = vadd.f32 0.0, %v1791
        %1793 = vmatprep.mubr.bf16.mxu0 %v1639
        %1794 = vmatmul.mubr.bf16.gmra.mrb[0].mxu0 %v1638
        %v1795 = vpop.f32.mrb[0].mxu0
        %v1796 = vadd.f32 0.0, %v1795
        %v1797 = vpop.f32.mrb[0].mxu0
        %v1798 = vadd.f32 0.0, %v1797
        %v1799 = vpop.f32.mrb[0].mxu0
        %v1800 = vadd.f32 0.0, %v1799
        %v1801 = vpop.f32.mrb[0].mxu0
        %v1802 = vadd.f32 0.0, %v1801
        %1803 = vdwg.mxu0
        %1804 = vmatprep.subr.bf16.mxu0 %v1482
        %1805 = vmatpush1.bf16.msra.mxu0 %v1481
        %1806 = vmatprep.subr.bf16.mxu0 %v1485
        %1807 = vmatpush1.bf16.msra.mxu0 %v1484
        %1808 = vmatprep.subr.bf16.mxu0 %v1488
        %1809 = vmatpush1.bf16.msra.mxu0 %v1487
        %1810 = vmatprep.subr.bf16.mxu0 %v1491
        %1811 = vmatpush1.bf16.msra.mxu0 %v1490
        %1812 = vmatprep.subr.bf16.mxu0 %v1494
        %1813 = vmatpush1.bf16.msra.mxu0 %v1493
        %1814 = vmatprep.subr.bf16.mxu0 %v1497
        %1815 = vmatpush1.bf16.msra.mxu0 %v1496
        %1816 = vmatprep.subr.bf16.mxu0 %v1500
        %1817 = vmatpush1.bf16.msra.mxu0 %v1499
        %1818 = vmatprep.subr.bf16.mxu0 %v1503
        %1819 = vmatpush1.bf16.msra.mxu0 %v1502
        %1820 = vmatprep.subr.bf16.mxu0 %v1506
        %1821 = vmatpush1.bf16.msra.mxu0 %v1505
        %1822 = vmatprep.subr.bf16.mxu0 %v1509
        %1823 = vmatpush1.bf16.msra.mxu0 %v1508
        %1824 = vmatprep.subr.bf16.mxu0 %v1512
        %1825 = vmatpush1.bf16.msra.mxu0 %v1511
        %1826 = vmatprep.subr.bf16.mxu0 0
        %1827 = vmatpush1.bf16.msra.mxu0 0
        %1828 = vmatprep.subr.bf16.mxu0 0
        %1829 = vmatpush1.bf16.msra.mxu0 0
        %1830 = vmatprep.subr.bf16.mxu0 0
        %1831 = vmatpush1.bf16.msra.mxu0 0
        %1832 = vmatprep.subr.bf16.mxu0 0
        %1833 = vmatpush1.bf16.msra.mxu0 0
        %1834 = vmatprep.subr.bf16.mxu0 0
        %1835 = vmatpush1.bf16.msra.mxu0 0
        %1836 = vmatprep.mubr.bf16.mxu0 %v1668
        %1837 = vmatmul.mubr.bf16.gmra.mrb[0].mxu0 %v1612
        %v1838 = vpop.f32.mrb[0].mxu0
        %v1839 = vadd.f32 %v1726, %v1838
        %v1840 = vpop.f32.mrb[0].mxu0
        %v1841 = vadd.f32 %v1728, %v1840
        %v1842 = vpop.f32.mrb[0].mxu0
        %v1843 = vadd.f32 %v1730, %v1842
        %v1844 = vpop.f32.mrb[0].mxu0
        %v1845 = vadd.f32 %v1732, %v1844
        %1846 = vmatprep.mubr.bf16.mxu0 %v1671
        %1847 = vmatmul.mubr.bf16.gmra.mrb[0].mxu0 %v1616
        %v1848 = vpop.f32.mrb[0].mxu0
        %v1849 = vadd.f32 %v1736, %v1848
        %v1850 = vpop.f32.mrb[0].mxu0
        %v1851 = vadd.f32 %v1738, %v1850
        %v1852 = vpop.f32.mrb[0].mxu0
        %v1853 = vadd.f32 %v1740, %v1852
        %v1854 = vpop.f32.mrb[0].mxu0
        %v1855 = vadd.f32 %v1742, %v1854
        %1856 = vmatprep.mubr.bf16.mxu0 %v1674
        %1857 = vmatmul.mubr.bf16.gmra.mrb[0].mxu0 %v1620
        %v1858 = vpop.f32.mrb[0].mxu0
        %v1859 = vadd.f32 %v1746, %v1858
        %v1860 = vpop.f32.mrb[0].mxu0
        %v1861 = vadd.f32 %v1748, %v1860
        %v1862 = vpop.f32.mrb[0].mxu0
        %v1863 = vadd.f32 %v1750, %v1862
        %v1864 = vpop.f32.mrb[0].mxu0
        %v1865 = vadd.f32 %v1752, %v1864
        %1866 = vmatprep.mubr.bf16.mxu0 %v1677
        %1867 = vmatmul.mubr.bf16.gmra.mrb[0].mxu0 %v1624
        %v1868 = vpop.f32.mrb[0].mxu0
        %v1869 = vadd.f32 %v1756, %v1868
        %v1870 = vpop.f32.mrb[0].mxu0
        %v1871 = vadd.f32 %v1758, %v1870
        %v1872 = vpop.f32.mrb[0].mxu0
        %v1873 = vadd.f32 %v1760, %v1872
        %v1874 = vpop.f32.mrb[0].mxu0
        %v1875 = vadd.f32 %v1762, %v1874
        %1876 = vmatprep.mubr.bf16.mxu0 %v1680
        %1877 = vmatmul.mubr.bf16.gmra.mrb[0].mxu0 %v1628
        %v1878 = vpop.f32.mrb[0].mxu0
        %v1879 = vadd.f32 %v1766, %v1878
        %v1880 = vpop.f32.mrb[0].mxu0
        %v1881 = vadd.f32 %v1768, %v1880
        %v1882 = vpop.f32.mrb[0].mxu0
        %v1883 = vadd.f32 %v1770, %v1882
        %v1884 = vpop.f32.mrb[0].mxu0
        %v1885 = vadd.f32 %v1772, %v1884
        %1886 = vmatprep.mubr.bf16.mxu0 %v1683
        %1887 = vmatmul.mubr.bf16.gmra.mrb[0].mxu0 %v1632
        %v1888 = vpop.f32.mrb[0].mxu0
        %v1889 = vadd.f32 %v1776, %v1888
        %v1890 = vpop.f32.mrb[0].mxu0
        %v1891 = vadd.f32 %v1778, %v1890
        %v1892 = vpop.f32.mrb[0].mxu0
        %v1893 = vadd.f32 %v1780, %v1892
        %v1894 = vpop.f32.mrb[0].mxu0
        %v1895 = vadd.f32 %v1782, %v1894
        %1896 = vmatprep.mubr.bf16.mxu0 %v1686
        %1897 = vmatmul.mubr.bf16.gmra.mrb[0].mxu0 %v1636
        %v1898 = vpop.f32.mrb[0].mxu0
        %v1899 = vadd.f32 %v1786, %v1898
        %v1900 = vpop.f32.mrb[0].mxu0
        %v1901 = vadd.f32 %v1788, %v1900
        %v1902 = vpop.f32.mrb[0].mxu0
        %v1903 = vadd.f32 %v1790, %v1902
        %v1904 = vpop.f32.mrb[0].mxu0
        %v1905 = vadd.f32 %v1792, %v1904
        %1906 = vmatprep.mubr.bf16.mxu0 %v1689
        %1907 = vmatmul.mubr.bf16.gmra.mrb[0].mxu0 %v1640
        %v1908 = vpop.f32.mrb[0].mxu0
        %v1909 = vadd.f32 %v1796, %v1908
        %v1910 = vpop.f32.mrb[0].mxu0
        %v1911 = vadd.f32 %v1798, %v1910
        %v1912 = vpop.f32.mrb[0].mxu0
        %v1913 = vadd.f32 %v1800, %v1912
        %v1914 = vpop.f32.mrb[0].mxu0
        %v1915 = vadd.f32 %v1802, %v1914
        %1916 = vdwg.mxu0
        %1917 = vmatprep.subr.bf16.mxu0 0
        %1918 = vmatpush1.bf16.msra.mxu0 %v1435
        %1919 = vmatprep.subr.bf16.mxu0 0
        %1920 = vmatpush1.bf16.msra.mxu0 %v1438
        %1921 = vmatprep.subr.bf16.mxu0 0
        %1922 = vmatpush1.bf16.msra.mxu0 %v1441
        %1923 = vmatprep.subr.bf16.mxu0 0
        %1924 = vmatpush1.bf16.msra.mxu0 %v1444
        %1925 = vmatprep.subr.bf16.mxu0 0
        %1926 = vmatpush1.bf16.msra.mxu0 %v1447
        %1927 = vmatprep.subr.bf16.mxu0 0
        %1928 = vmatpush1.bf16.msra.mxu0 %v1450
        %1929 = vmatprep.subr.bf16.mxu0 0
        %1930 = vmatpush1.bf16.msra.mxu0 %v1453
        %1931 = vmatprep.subr.bf16.mxu0 0
        %1932 = vmatpush1.bf16.msra.mxu0 %v1456
        %1933 = vmatprep.subr.bf16.mxu0 0
        %1934 = vmatpush1.bf16.msra.mxu0 %v1459
        %1935 = vmatprep.subr.bf16.mxu0 0
        %1936 = vmatpush1.bf16.msra.mxu0 %v1462
        %1937 = vmatprep.subr.bf16.mxu0 0
        %1938 = vmatpush1.bf16.msra.mxu0 %v1465
        %1939 = vmatprep.subr.bf16.mxu0 0
        %1940 = vmatpush1.bf16.msra.mxu0 %v1468
        %1941 = vmatprep.subr.bf16.mxu0 0
        %1942 = vmatpush1.bf16.msra.mxu0 %v1471
        %1943 = vmatprep.subr.bf16.mxu0 0
        %1944 = vmatpush1.bf16.msra.mxu0 %v1474
        %1945 = vmatprep.subr.bf16.mxu0 0
        %1946 = vmatpush1.bf16.msra.mxu0 %v1477
        %1947 = vmatprep.subr.bf16.mxu0 0
        %1948 = vmatpush1.bf16.msra.mxu0 %v1480
        %1949 = vmatprep.mubr.bf16.mxu0 %v1611
        %1950 = vmatmul.mubr.bf16.gmra.mrb[0].mxu0 %v1610
        %v1951 = vpop.f32.mrb[0].mxu0
        %v1952 = vadd.f32 0.0, %v1951
        %v1953 = vpop.f32.mrb[0].mxu0
        %v1954 = vpop.f32.mrb[0].mxu0
        %v1955 = vadd.f32 0.0, %v1954
        %v1956 = vpop.f32.mrb[0].mxu0
        %1957 = vmatprep.mubr.bf16.mxu0 %v1615
        %1958 = vmatmul.mubr.bf16.gmra.mrb[0].mxu0 %v1614
        %v1959 = vpop.f32.mrb[0].mxu0
        %v1960 = vadd.f32 0.0, %v1959
        %v1961 = vpop.f32.mrb[0].mxu0
        %v1962 = vpop.f32.mrb[0].mxu0
        %v1963 = vadd.f32 0.0, %v1962
        %v1964 = vpop.f32.mrb[0].mxu0
        %1965 = vmatprep.mubr.bf16.mxu0 %v1619
        %1966 = vmatmul.mubr.bf16.gmra.mrb[0].mxu0 %v1618
        %v1967 = vpop.f32.mrb[0].mxu0
        %v1968 = vadd.f32 0.0, %v1967
        %v1969 = vpop.f32.mrb[0].mxu0
        %v1970 = vpop.f32.mrb[0].mxu0
        %v1971 = vadd.f32 0.0, %v1970
        %v1972 = vpop.f32.mrb[0].mxu0
        %1973 = vmatprep.mubr.bf16.mxu0 %v1623
        %1974 = vmatmul.mubr.bf16.gmra.mrb[0].mxu0 %v1622
        %v1975 = vpop.f32.mrb[0].mxu0
        %v1976 = vadd.f32 0.0, %v1975
        %v1977 = vpop.f32.mrb[0].mxu0
        %v1978 = vpop.f32.mrb[0].mxu0
        %v1979 = vadd.f32 0.0, %v1978
        %v1980 = vpop.f32.mrb[0].mxu0
        %1981 = vmatprep.mubr.bf16.mxu0 %v1627
        %1982 = vmatmul.mubr.bf16.gmra.mrb[0].mxu0 %v1626
        %v1983 = vpop.f32.mrb[0].mxu0
        %v1984 = vadd.f32 0.0, %v1983
        %v1985 = vpop.f32.mrb[0].mxu0
        %v1986 = vpop.f32.mrb[0].mxu0
        %v1987 = vadd.f32 0.0, %v1986
        %v1988 = vpop.f32.mrb[0].mxu0
        %1989 = vmatprep.mubr.bf16.mxu0 %v1631
        %1990 = vmatmul.mubr.bf16.gmra.mrb[0].mxu0 %v1630
        %v1991 = vpop.f32.mrb[0].mxu0
        %v1992 = vadd.f32 0.0, %v1991
        %v1993 = vpop.f32.mrb[0].mxu0
        %v1994 = vpop.f32.mrb[0].mxu0
        %v1995 = vadd.f32 0.0, %v1994
        %v1996 = vpop.f32.mrb[0].mxu0
        %1997 = vmatprep.mubr.bf16.mxu0 %v1635
        %1998 = vmatmul.mubr.bf16.gmra.mrb[0].mxu0 %v1634
        %v1999 = vpop.f32.mrb[0].mxu0
        %v2000 = vadd.f32 0.0, %v1999
        %v2001 = vpop.f32.mrb[0].mxu0
        %v2002 = vpop.f32.mrb[0].mxu0
        %v2003 = vadd.f32 0.0, %v2002
        %v2004 = vpop.f32.mrb[0].mxu0
        %2005 = vmatprep.mubr.bf16.mxu0 %v1639
        %2006 = vmatmul.mubr.bf16.gmra.mrb[0].mxu0 %v1638
        %v2007 = vpop.f32.mrb[0].mxu0
        %v2008 = vadd.f32 0.0, %v2007
        %v2009 = vpop.f32.mrb[0].mxu0
        %v2010 = vpop.f32.mrb[0].mxu0
        %v2011 = vadd.f32 0.0, %v2010
        %v2012 = vpop.f32.mrb[0].mxu0
        %2013 = vdwg.mxu0
        %2014 = vmatprep.subr.bf16.mxu0 0
        %2015 = vmatpush1.bf16.msra.mxu0 %v1483
        %2016 = vmatprep.subr.bf16.mxu0 0
        %2017 = vmatpush1.bf16.msra.mxu0 %v1486
        %2018 = vmatprep.subr.bf16.mxu0 0
        %2019 = vmatpush1.bf16.msra.mxu0 %v1489
        %2020 = vmatprep.subr.bf16.mxu0 0
        %2021 = vmatpush1.bf16.msra.mxu0 %v1492
        %2022 = vmatprep.subr.bf16.mxu0 0
        %2023 = vmatpush1.bf16.msra.mxu0 %v1495
        %2024 = vmatprep.subr.bf16.mxu0 0
        %2025 = vmatpush1.bf16.msra.mxu0 %v1498
        %2026 = vmatprep.subr.bf16.mxu0 0
        %2027 = vmatpush1.bf16.msra.mxu0 %v1501
        %2028 = vmatprep.subr.bf16.mxu0 0
        %2029 = vmatpush1.bf16.msra.mxu0 %v1504
        %2030 = vmatprep.subr.bf16.mxu0 0
        %2031 = vmatpush1.bf16.msra.mxu0 %v1507
        %2032 = vmatprep.subr.bf16.mxu0 0
        %2033 = vmatpush1.bf16.msra.mxu0 %v1510
        %2034 = vmatprep.subr.bf16.mxu0 0
        %2035 = vmatpush1.bf16.msra.mxu0 %v1513
        %2036 = vmatprep.subr.bf16.mxu0 0
        %2037 = vmatpush1.bf16.msra.mxu0 0
        %2038 = vmatprep.subr.bf16.mxu0 0
        %2039 = vmatpush1.bf16.msra.mxu0 0
        %2040 = vmatprep.subr.bf16.mxu0 0
        %2041 = vmatpush1.bf16.msra.mxu0 0
        %2042 = vmatprep.subr.bf16.mxu0 0
        %2043 = vmatpush1.bf16.msra.mxu0 0
        %2044 = vmatprep.subr.bf16.mxu0 0
        %2045 = vmatpush1.bf16.msra.mxu0 0
        %2046 = vmatprep.mubr.bf16.mxu0 %v1668
        %2047 = vmatmul.mubr.bf16.gmra.mrb[0].mxu0 %v1612
        %v2048 = vpop.f32.mrb[0].mxu0
        %v2049 = vadd.f32 %v1952, %v2048
        %v2050 = vpop.f32.mrb[0].mxu0
        %v2051 = vpop.f32.mrb[0].mxu0
        %v2052 = vadd.f32 %v1955, %v2051
        %v2053 = vpop.f32.mrb[0].mxu0
        %2054 = vmatprep.mubr.bf16.mxu0 %v1671
        %2055 = vmatmul.mubr.bf16.gmra.mrb[0].mxu0 %v1616
        %v2056 = vpop.f32.mrb[0].mxu0
        %v2057 = vadd.f32 %v1960, %v2056
        %v2058 = vpop.f32.mrb[0].mxu0
        %v2059 = vpop.f32.mrb[0].mxu0
        %v2060 = vadd.f32 %v1963, %v2059
        %v2061 = vpop.f32.mrb[0].mxu0
        %2062 = vmatprep.mubr.bf16.mxu0 %v1674
        %2063 = vmatmul.mubr.bf16.gmra.mrb[0].mxu0 %v1620
        %v2064 = vpop.f32.mrb[0].mxu0
        %v2065 = vadd.f32 %v1968, %v2064
        %v2066 = vpop.f32.mrb[0].mxu0
        %v2067 = vpop.f32.mrb[0].mxu0
        %v2068 = vadd.f32 %v1971, %v2067
        %v2069 = vpop.f32.mrb[0].mxu0
        %2070 = vmatprep.mubr.bf16.mxu0 %v1677
        %2071 = vmatmul.mubr.bf16.gmra.mrb[0].mxu0 %v1624
        %v2072 = vpop.f32.mrb[0].mxu0
        %v2073 = vadd.f32 %v1976, %v2072
        %v2074 = vpop.f32.mrb[0].mxu0
        %v2075 = vpop.f32.mrb[0].mxu0
        %v2076 = vadd.f32 %v1979, %v2075
        %v2077 = vpop.f32.mrb[0].mxu0
        %2078 = vmatprep.mubr.bf16.mxu0 %v1680
        %2079 = vmatmul.mubr.bf16.gmra.mrb[0].mxu0 %v1628
        %v2080 = vpop.f32.mrb[0].mxu0
        %v2081 = vadd.f32 %v1984, %v2080
        %v2082 = vpop.f32.mrb[0].mxu0
        %v2083 = vpop.f32.mrb[0].mxu0
        %v2084 = vadd.f32 %v1987, %v2083
        %v2085 = vpop.f32.mrb[0].mxu0
        %2086 = vmatprep.mubr.bf16.mxu0 %v1683
        %2087 = vmatmul.mubr.bf16.gmra.mrb[0].mxu0 %v1632
        %v2088 = vpop.f32.mrb[0].mxu0
        %v2089 = vadd.f32 %v1992, %v2088
        %v2090 = vpop.f32.mrb[0].mxu0
        %v2091 = vpop.f32.mrb[0].mxu0
        %v2092 = vadd.f32 %v1995, %v2091
        %v2093 = vpop.f32.mrb[0].mxu0
        %2094 = vmatprep.mubr.bf16.mxu0 %v1686
        %2095 = vmatmul.mubr.bf16.gmra.mrb[0].mxu0 %v1636
        %v2096 = vpop.f32.mrb[0].mxu0
        %v2097 = vadd.f32 %v2000, %v2096
        %v2098 = vpop.f32.mrb[0].mxu0
        %v2099 = vpop.f32.mrb[0].mxu0
        %v2100 = vadd.f32 %v2003, %v2099
        %v2101 = vpop.f32.mrb[0].mxu0
        %2102 = vmatprep.mubr.bf16.mxu0 %v1689
        %2103 = vmatmul.mubr.bf16.gmra.mrb[0].mxu0 %v1640
        %v2104 = vpop.f32.mrb[0].mxu0
        %v2105 = vadd.f32 %v2008, %v2104
        %v2106 = vpop.f32.mrb[0].mxu0
        %v2107 = vpop.f32.mrb[0].mxu0
        %v2108 = vadd.f32 %v2011, %v2107
        %v2109 = vpop.f32.mrb[0].mxu0
        %2110 = vdwg.mxu0
        %v2111 = vxor.u32 %v1839, 2147483648
        %v2112 = vxor.u32 %v1841, 2147483648
        %v2113 = vxor.u32 %v2049, 2147483648
        %v2114 = vxor.u32 %v1843, 2147483648
        %v2115 = vxor.u32 %v1845, 2147483648
        %v2116 = vxor.u32 %v2052, 2147483648
        %v2117 = vxor.u32 %v1849, 2147483648
        %v2118 = vxor.u32 %v1851, 2147483648
        %v2119 = vxor.u32 %v2057, 2147483648
        %v2120 = vxor.u32 %v1853, 2147483648
        %v2121 = vxor.u32 %v1855, 2147483648
        %v2122 = vxor.u32 %v2060, 2147483648
        %v2123 = vmul.f32 %v2111, 1.442695
        %v2124 = vpow.pop %v2123
        %v2125 = vmul.f32 %v2112, 1.442695
        %v2126 = vpow.pop %v2125
        %v2127 = vmul.f32 %v2113, 1.442695
        %v2128 = vpow.pop %v2127
        %v2129 = vmul.f32 %v2114, 1.442695
        %v2130 = vpow.pop %v2129
        %v2131 = vmul.f32 %v2115, 1.442695
        %v2132 = vpow.pop %v2131
        %v2133 = vmul.f32 %v2116, 1.442695
        %v2134 = vpow.pop %v2133
        %v2135 = vmul.f32 %v2117, 1.442695
        %v2136 = vpow.pop %v2135
        %v2137 = vmul.f32 %v2118, 1.442695
        %v2138 = vpow.pop %v2137
        %v2139 = vmul.f32 %v2119, 1.442695
        %v2140 = vpow.pop %v2139
        %v2141 = vmul.f32 %v2120, 1.442695
        %v2142 = vpow.pop %v2141
        %v2143 = vmul.f32 %v2121, 1.442695
        %v2144 = vpow.pop %v2143
        %v2145 = vmul.f32 %v2122, 1.442695
        %v2146 = vpow.pop %v2145
        %v2147 = vadd.f32 %v2124, 1.0
        %v2148 = vadd.f32 %v2126, 1.0
        %v2149 = vadd.f32 %v2128, 1.0
        %v2150 = vadd.f32 %v2130, 1.0
        %v2151 = vadd.f32 %v2132, 1.0
        %v2152 = vadd.f32 %v2134, 1.0
        %v2153 = vadd.f32 %v2136, 1.0
        %v2154 = vadd.f32 %v2138, 1.0
        %v2155 = vadd.f32 %v2140, 1.0
        %v2156 = vadd.f32 %v2142, 1.0
        %v2157 = vadd.f32 %v2144, 1.0
        %v2158 = vadd.f32 %v2146, 1.0
        %v2159 = vrcp.pop %v2147
        %v2160 = vmul.f32 1.0, %v2159
        %v2161 = vrcp.pop %v2148
        %v2162 = vmul.f32 1.0, %v2161
        %v2163 = vrcp.pop %v2149
        %v2164 = vmul.f32 1.0, %v2163
        %v2165 = vrcp.pop %v2150
        %v2166 = vmul.f32 1.0, %v2165
        %v2167 = vrcp.pop %v2151
        %v2168 = vmul.f32 1.0, %v2167
        %v2169 = vrcp.pop %v2152
        %v2170 = vmul.f32 1.0, %v2169
        %v2171 = vrcp.pop %v2153
        %v2172 = vmul.f32 1.0, %v2171
        %v2173 = vrcp.pop %v2154
        %v2174 = vmul.f32 1.0, %v2173
        %v2175 = vrcp.pop %v2155
        %v2176 = vmul.f32 1.0, %v2175
        %v2177 = vrcp.pop %v2156
        %v2178 = vmul.f32 1.0, %v2177
        %v2179 = vrcp.pop %v2157
        %v2180 = vmul.f32 1.0, %v2179
        %v2181 = vrcp.pop %v2158
        %v2182 = vmul.f32 1.0, %v2181
        %v2183 = vmul.f32 %v2160, %v1879
        %v2184 = vmul.f32 %v2162, %v1881
        %v2185 = vmul.f32 %v2164, %v2081
        %v2186 = vmul.f32 %v2166, %v1883
        %v2187 = vmul.f32 %v2168, %v1885
        %v2188 = vmul.f32 %v2170, %v2084
        %v2189 = vmul.f32 %v2172, %v1889
        %v2190 = vmul.f32 %v2174, %v1891
        %v2191 = vmul.f32 %v2176, %v2089
        %v2192 = vmul.f32 %v2178, %v1893
        %v2193 = vmul.f32 %v2180, %v1895
        %v2194 = vmul.f32 %v2182, %v2092
        %v2195 = vadd.f32 %v1859, %v2183
        %v2196 = vadd.f32 %v1861, %v2184
        %v2197 = vadd.f32 %v2065, %v2185
        %v2198 = vadd.f32 %v1863, %v2186
        %v2199 = vadd.f32 %v1865, %v2187
        %v2200 = vadd.f32 %v2068, %v2188
        %v2201 = vadd.f32 %v1869, %v2189
        %v2202 = vadd.f32 %v1871, %v2190
        %v2203 = vadd.f32 %v2073, %v2191
        %v2204 = vadd.f32 %v1873, %v2192
        %v2205 = vadd.f32 %v1875, %v2193
        %v2206 = vadd.f32 %v2076, %v2194
        %v2207 = vtanh.pop %v2195
        %v2208 = vtanh.pop %v2196
        %v2209 = vtanh.pop %v2197
        %v2210 = vtanh.pop %v2198
        %v2211 = vtanh.pop %v2199
        %v2212 = vtanh.pop %v2200
        %v2213 = vtanh.pop %v2201
        %v2214 = vtanh.pop %v2202
        %v2215 = vtanh.pop %v2203
        %v2216 = vtanh.pop %v2204
        %v2217 = vtanh.pop %v2205
        %v2218 = vtanh.pop %v2206
        %v2219 = vsub.f32 %v1899, %v2207
        %v2220 = vsub.f32 %v1901, %v2208
        %v2221 = vsub.f32 %v2097, %v2209
        %v2222 = vsub.f32 %v1903, %v2210
        %v2223 = vsub.f32 %v1905, %v2211
        %v2224 = vsub.f32 %v2100, %v2212
        %v2225 = vsub.f32 %v1909, %v2213
        %v2226 = vsub.f32 %v1911, %v2214
        %v2227 = vsub.f32 %v2105, %v2215
        %v2228 = vsub.f32 %v1913, %v2216
        %v2229 = vsub.f32 %v1915, %v2217
        %v2230 = vsub.f32 %v2108, %v2218
        %v2231 = vmul.f32 %v2160, %v2219
        %v2232 = vmul.f32 %v2162, %v2220
        %v2233 = vmul.f32 %v2164, %v2221
        %v2234 = vmul.f32 %v2166, %v2222
        %v2235 = vmul.f32 %v2168, %v2223
        %v2236 = vmul.f32 %v2170, %v2224
        %v2237 = vmul.f32 %v2172, %v2225
        %v2238 = vmul.f32 %v2174, %v2226
        %v2239 = vmul.f32 %v2176, %v2227
        %v2240 = vmul.f32 %v2178, %v2228
        %v2241 = vmul.f32 %v2180, %v2229
        %v2242 = vmul.f32 %v2182, %v2230
        %v2243 = vadd.f32 %v2207, %v2231
        %v2244 = vadd.f32 %v2208, %v2232
        %v2245 = vadd.f32 %v2209, %v2233
        %v2246 = vadd.f32 %v2210, %v2234
        %v2247 = vadd.f32 %v2211, %v2235
        %v2248 = vadd.f32 %v2212, %v2236
        %v2249 = vadd.f32 %v2213, %v2237
        %v2250 = vadd.f32 %v2214, %v2238
        %v2251 = vadd.f32 %v2215, %v2239
        %v2252 = vadd.f32 %v2216, %v2240
        %v2253 = vadd.f32 %v2217, %v2241
        %v2254 = vadd.f32 %v2218, %v2242
        %2255 = vst [vmem:[%s296] sm:$0xff] %v2243
        %2256 = vst [vmem:[%s296 + $0x8] sm:$0xff] %v2244
        %2257 = vst [vmem:[%s296 + $0x10] sm:$0xff] %v2245
        %2258 = vst [vmem:[%s296 + $0x18] sm:$0xff] %v2246
        %2259 = vst [vmem:[%s296 + $0x20] sm:$0xff] %v2247
        %2260 = vst [vmem:[%s296 + $0x28] sm:$0xff] %v2248
        %2261 = vst [vmem:[%s296 + $0x30] sm:$0xff] %v2249
        %2262 = vst [vmem:[%s296 + $0x38] sm:$0xff] %v2250
        %2263 = vst [vmem:[%s296 + $0x40] sm:$0xff] %v2251
        %2264 = vst [vmem:[%s296 + $0x48] sm:$0xff] %v2252
        %2265 = vst [vmem:[%s296 + $0x50] sm:$0xff] %v2253
        %2266 = vst [vmem:[%s296 + $0x58] sm:$0xff] %v2254
        %s2267 = sand.u32 %s95, 1
        %s2268 = sand.u32 %s95, 1
        %s2269 = smul.addr %s2268, 96
        %s2270 = scalar_lea.vmem [#allocation5], %s2269
        // Predicated region
        $region100: #{conv_mgu_cell.1} parent=90 // pred_check
          %p2271 = pneg %p105
        $region101: #{conv_mgu_cell.1} parent=90 // pred_check_branch
          %2273 = sbr.rel (%p2271) target = $region103
        $region102: #{conv_mgu_cell.1} parent=90 // pred_region
          %s2274 = smul.u32 3, %s14
          %s2275 = smul.addr %s2274, 8
          %s2276 = scalar_lea.vmem %s3, %s2275
          // Predicated region
          $region104: #{conv_mgu_cell.1} parent=102 // pred_check
            _
          $region105: #{conv_mgu_cell.1} parent=102 // pred_check_branch
            %2278 = sbr.rel (0) target = $region107
          $region106: #{conv_mgu_cell.1} parent=102 // pred_region
            // Predicated region
            $region108: #{conv_mgu_cell.1} parent=106 // pred_check
              _
            $region109: #{conv_mgu_cell.1} parent=106 // pred_check_branch
              %2280 = sbr.rel (0) target = $region111
            $region110: #{conv_mgu_cell.1} parent=106 // pred_region
              loop: start=0, step=1, limit=1
              $region112: #{conv_mgu_cell.1} parent=110 // loop_pre_header
                _
              $region113: #{conv_mgu_cell.1} parent=110 // loop_header
                %s2282 = sphi 0, %s2286
                %p2283 = scmp.ge.s32.totalorder %s2282, 1
                %s2287 = sphi %s2270, %s2270
                %s2288 = sphi %s2276, %s2276
              $region114: #{conv_mgu_cell.1} parent=110 // loop_header_branch
                %2285 = sbr.rel (%p2283) target = $region118
              $region115: #{conv_mgu_cell.1} parent=110 // loop_body
                %v2289 = vld [vmem:[%s2287] sm:$0xff]
                %2290 = vst [vmem:[%s2288] sm:$0xff] %v2289
                %v2291 = vld [vmem:[%s2287 + $0x8] sm:$0xff]
                %2292 = vst [vmem:[%s2288 + $0x8] sm:$0xff] %v2291
                %v2293 = vld [vmem:[%s2287 + $0x10] sm:$0xff]
                %2294 = vst [vmem:[%s2288 + $0x10] sm:$0xff] %v2293
                %v2295 = vld [vmem:[%s2287 + $0x18] sm:$0xff]
                %2296 = vst [vmem:[%s2288 + $0x30] sm:$0xff] %v2295
                %v2297 = vld [vmem:[%s2287 + $0x20] sm:$0xff]
                %2298 = vst [vmem:[%s2288 + $0x38] sm:$0xff] %v2297
                %v2299 = vld [vmem:[%s2287 + $0x28] sm:$0xff]
                %2300 = vst [vmem:[%s2288 + $0x40] sm:$0xff] %v2299
                %v2301 = vld [vmem:[%s2287 + $0x30] sm:$0xff]
                %2302 = vst [vmem:[%s2288 + $0x60] sm:$0xff] %v2301
                %v2303 = vld [vmem:[%s2287 + $0x38] sm:$0xff]
                %2304 = vst [vmem:[%s2288 + $0x68] sm:$0xff] %v2303
                %v2305 = vld [vmem:[%s2287 + $0x40] sm:$0xff]
                %2306 = vst [vmem:[%s2288 + $0x70] sm:$0xff] %v2305
                %v2307 = vld [vmem:[%s2287 + $0x48] sm:$0xff]
                %2308 = vst [vmem:[%s2288 + $0x90] sm:$0xff] %v2307
                %v2309 = vld [vmem:[%s2287 + $0x50] sm:$0xff]
                %2310 = vst [vmem:[%s2288 + $0x98] sm:$0xff] %v2309
                %v2311 = vld [vmem:[%s2287 + $0x58] sm:$0xff]
                %2312 = vst [vmem:[%s2288 + $0xa0] sm:$0xff] %v2311
              $region116: #{conv_mgu_cell.1} parent=110 // loop_footer
                %s2286 = sadd.s32 1, %s2282
              $region117: #{conv_mgu_cell.1} parent=110 // loop_footer_branch
                %2281 = sbr.rel target = $region113
              $region118: #{conv_mgu_cell.1} parent=110 // loop_exit
                _
            $region111: #{conv_mgu_cell.1} parent=106 // pred_fallthru
              _
            // Predicated region
            $region119: #{conv_mgu_cell.1} parent=106 // pred_check
              _
            $region120: #{conv_mgu_cell.1} parent=106 // pred_check_branch
              %2314 = sbr.rel target = $region122
            $region121: #{conv_mgu_cell.1} parent=106 // pred_region
              _
            $region122: #{conv_mgu_cell.1} parent=106 // pred_fallthru
              _
          $region107: #{conv_mgu_cell.1} parent=102 // pred_fallthru
            _
          %2315 = vnop
        $region103: #{conv_mgu_cell.1} parent=90 // pred_fallthru
          _
      $region91: #{conv_mgu_cell.1} parent=5 // pred_fallthru
        _
      %p2316 = scmp.le.s32.totalorder 2, %s9
      // Predicated region
      $region123: #{conv_mgu_cell.1} parent=5 // pred_check
        %p2317 = pneg %p2316
      $region124: #{conv_mgu_cell.1} parent=5 // pred_check_branch
        %2319 = sbr.rel (%p2317) target = $region126
      $region125: #{conv_mgu_cell.1} parent=5 // pred_region
        %s2320 = ssub.s32 %s9, 2
        // Predicated region
        $region127: #{conv_mgu_cell.1} parent=125 // pred_check
          %p2321 = pneg %p111
        $region128: #{conv_mgu_cell.1} parent=125 // pred_check_branch
          %2323 = sbr.rel (%p2321) target = $region130
        $region129: #{conv_mgu_cell.1} parent=125 // pred_region
          %s2324 = sand.u32 %s96, 1
          %s2325 = sand.u32 %s96, 1
          %s2326 = smul.addr %s2325, 96
          %s2327 = scalar_lea.vmem [#allocation5], %s2326
        $region130: #{conv_mgu_cell.1} parent=125 // pred_fallthru
          _
      $region126: #{conv_mgu_cell.1} parent=5 // pred_fallthru
        _
    $region6: #{conv_mgu_cell.1} parent=1 // loop_footer
      %s13 = sadd.s32 1, %s9
    $region7: #{conv_mgu_cell.1} parent=1 // loop_footer_branch
      %8 = sbr.rel target = $region3
    $region8: #{conv_mgu_cell.1} parent=1 // loop_exit
      _

</llo_original>
